<compile_context>
chip_gen: v7x
topology: tpu7x:2x2x1
jax: 0.10.0
libtpu: 0.0.40
codegen_flags: <defaults>
</compile_context>

<pallas_src>
import functools

import jax
import jax.numpy as jnp
from jax.experimental import pallas as pl
from jax.experimental.pallas import tpu as pltpu


# ----------------------------- Pallas kernel --------------------------------


def _layernorm(x, gamma, beta, eps=1e-5):
    x = x.astype(jnp.float32)
    mu = jnp.mean(x, axis=-1, keepdims=True)
    var = jnp.mean((x - mu) ** 2, axis=-1, keepdims=True)
    return (x - mu) * jax.lax.rsqrt(var + eps) * gamma + beta


def fused_encoder_kernel(
    x_ref,        # (rows, E)      input embeddings block (f32)
    wqkv_ref,     # (1, E, 3*H*E)  layer-l fused QKV weight (mxu dtype)
    wp_ref,       # (1, H*E, E)    layer-l output projection (mxu dtype)
    bp_ref,       # (1, 1, E)      f32
    ln1_g_ref,    # (1, 1, E)
    ln1_b_ref,    # (1, 1, E)
    ln2_g_ref,    # (1, 1, E)
    ln2_b_ref,    # (1, 1, E)
    wf1_ref,      # (1, E, 4E)     (mxu dtype)
    bf1_ref,      # (1, 1, 4E)
    wf2_ref,      # (1, 4E, E)     (mxu dtype)
    bf2_ref,      # (1, 1, E)
    lnf_g_ref,    # (1, E)
    lnf_b_ref,    # (1, E)
    o_ref,        # (rows, E)
    x_acc_ref,    # scratch (rows, E) f32 — residual stream, VMEM-resident across layers
    heads_ref,    # scratch (rows, H*E) f32 — concat-free per-head outputs
    *,
    n_head: int,
    seq_len: int,
    approx_recip: bool,
    mxu_dtype,
):
    rows, E = x_acc_ref.shape
    T = seq_len
    Bb = rows // T
    H = n_head
    HE = H * E
    f32 = jnp.float32
    scale = 1.0 / (E ** 0.5)

    layer = pl.program_id(1)

    @pl.when(layer == 0)
    def _():  # load this batch tile's embeddings into the resident residual
        x_acc_ref[...] = x_ref[...].astype(f32)

    x = x_acc_ref[...]

    # --- multi-head self attention on ln1(x) --------------------------------
    xn = _layernorm(x, ln1_g_ref[0], ln1_b_ref[0])

    # One fused MXU matmul for every head's Q, K and V projection.
    qkv = jnp.dot(xn.astype(mxu_dtype), wqkv_ref[0],
                  preferred_element_type=f32)              # (rows, 3*H*E)
    qkv_m = qkv.astype(mxu_dtype)                          # cast once, slice per head

    # TODO(synk): switch to lax.fori_loop(unroll=True) / flash-style KV tiling
    # once H and T are nontrivial; H=2, T=8 here so a static loop is fine.
    for h in range(H):
        q = qkv_m[:, h * E:(h + 1) * E].reshape(Bb, T, E)
        k = qkv_m[:, HE + h * E:HE + (h + 1) * E].reshape(Bb, T, E)
        v = qkv_m[:, 2 * HE + h * E:2 * HE + (h + 1) * E].reshape(Bb, T, E)

        att = jnp.einsum("bqd,bkd->bqk", q, k,
                         preferred_element_type=f32) * scale     # (Bb, T, T) f32
        att = att - jnp.max(att, axis=-1, keepdims=True)
        p = jnp.exp(att)
        denom = jnp.sum(p, axis=-1, keepdims=True)
        if approx_recip:
            p = p * pl.reciprocal(denom, approx=True)            # EUP slot
        else:
            p = p / denom                                        # exact (f32 check path)

        out_h = jnp.einsum("bqk,bkd->bqd", p.astype(mxu_dtype), v,
                           preferred_element_type=f32)           # (Bb, T, E)
        heads_ref[:, h * E:(h + 1) * E] = out_h.reshape(rows, E)

    # Single deep output projection: (rows, H*E) @ (H*E, E).
    sa = jnp.dot(heads_ref[...].astype(mxu_dtype), wp_ref[0],
                 preferred_element_type=f32) + bp_ref[0]
    x = x + sa

    # --- feed forward on ln2(x) ---------------------------------------------
    xn2 = _layernorm(x, ln2_g_ref[0], ln2_b_ref[0])
    hmid = jnp.dot(xn2.astype(mxu_dtype), wf1_ref[0],
                   preferred_element_type=f32) + bf1_ref[0]
    hmid = jnp.maximum(hmid, 0.0)
    ff = jnp.dot(hmid.astype(mxu_dtype), wf2_ref[0],
                 preferred_element_type=f32) + bf2_ref[0]
    x = x + ff

    x_acc_ref[...] = x                                           # stays in VMEM

    @pl.when(layer == pl.num_programs(1) - 1)
    def _():  # final encoder LayerNorm fused into the last layer's epilogue
        y = _layernorm(x, lnf_g_ref[...], lnf_b_ref[...])
        o_ref[...] = y.astype(o_ref.dtype)


# ----------------------------- wrappers --------------------------------------


def _num_tensorcores_per_chip():
    try:
        d = jax.devices()[0]
        for attr in ("num_cores", "core_count"):
            v = getattr(d, attr, None)
            if isinstance(v, int) and v > 0:
                return v
    except Exception:
        pass
    return 1


def _choose_batch_block(B, T, E, H, n_cores):
    """Batch elements per grid step, VMEM-budgeted.

    Picks the largest slab that fits the activation budget (single-TC chips
    want one big slab); on multi-TC chips prefer a step count divisible by the
    core count so megacore sharding keeps both TensorCores busy.
    """
    per_row_bytes = 4 * (E + H * E + 3 * H * E + 4 * E + 2 * E)   # residual/heads/qkv/hmid/out
    score_bytes_per_batch = 4 * H * T * T
    budget = 24 << 20

    def ok(bb):
        rows = bb * T
        fits = rows * per_row_bytes + bb * score_bytes_per_batch <= budget
        legal = (rows % 8 == 0) or (bb == B)          # (8,128) block rule on rows
        return fits and legal

    divisors = [d for d in range(1, B + 1) if B % d == 0]
    cand = [d for d in divisors if ok(d)] or [B]
    if n_cores >= 2:
        multi = [d for d in cand if (B // d) % n_cores == 0]
        if multi:
            return max(multi)
    return max(cand)


@jax.jit
def transformer_encoder(idx, kparams):
    """idx: (B, T) int32 token ids -> (B, T, E) float32."""
    B, T = idx.shape
    tok_emb = kparams["tok_table"][idx]                    # gather (glue, outside kernel)
    pos_emb = kparams["pos_table"][:T]
    x = (tok_emb + pos_emb[None, :, :]).astype(jnp.float32)
    E = x.shape[-1]

    w_qkv = kparams["w_qkv"]                               # (L, E, 3*H*E)
    L = w_qkv.shape[0]
    H = w_qkv.shape[-1] // (3 * E)
    HE = H * E
    mxu_dtype = w_qkv.dtype                                # weights pre-cast in pack_params
    approx_recip = mxu_dtype == jnp.bfloat16

    bb = _choose_batch_block(B, T, E, H, _num_tensorcores_per_chip())
    n_steps = B // bb
    rows_blk = bb * T

    x2d = x.reshape(B * T, E)                              # flat (rows, E) slab at boundary

    kernel = functools.partial(
        fused_encoder_kernel,
        n_head=H, seq_len=T, approx_recip=approx_recip, mxu_dtype=mxu_dtype)

    wmap = lambda b, l: (l, 0, 0)                          # per-layer weight selection
    cmap2 = lambda b, l: (0, 0)                            # final-LN params (constant)

    # --- VMEM budget / cost estimate -----------------------------------------
    wbytes = jnp.dtype(mxu_dtype).itemsize
    weight_bytes_per_layer = (E * 3 * HE + HE * E + E * 4 * E + 4 * E * E) * wbytes \
        + (8 * E + 4 * E) * 4
    est = 2 * weight_bytes_per_layer                       # double-buffered layer weights
    est += 2 * 2 * rows_blk * E * 4                        # x in + out blocks (double-buffered)
    est += rows_blk * (E + HE) * 4                         # scratches
    est += rows_blk * (3 * HE + 4 * E) * 4 + 2 * bb * H * T * T * 4   # live intermediates
    vmem_limit = int(min(max(2 * est, 16 << 20), 64 << 20))

    flops_per_step_layer = (
        2 * rows_blk * E * 3 * HE          # fused QKV
        + 4 * H * bb * T * T * E           # scores + att @ v
        + 2 * rows_blk * HE * E            # output projection
        + 16 * rows_blk * E * E            # FFN
    )
    cost = pl.CostEstimate(
        flops=int(flops_per_step_layer * n_steps * L),
        transcendentals=int((H * bb * T * T + 3 * rows_blk) * n_steps * L),
        bytes_accessed=int(2 * B * T * E * 4 + n_steps * L * weight_bytes_per_layer),
    )

    out2d = pl.pallas_call(
        kernel,
        out_shape=jax.ShapeDtypeStruct((B * T, E), jnp.float32),
        grid_spec=pltpu.PrefetchScalarGridSpec(
            num_scalar_prefetch=0,
            grid=(n_steps, L),                              # layer axis innermost
            in_specs=[
                pl.BlockSpec((rows_blk, E), lambda b, l: (b, 0)),   # x (resident per batch tile)
                pl.BlockSpec((1, E, 3 * HE), wmap),                 # fused W_qkv[l]
                pl.BlockSpec((1, HE, E), wmap),                     # wp[l]
                pl.BlockSpec((1, 1, E), wmap),                      # bp[l]
                pl.BlockSpec((1, 1, E), wmap),                      # ln1 gamma[l]
                pl.BlockSpec((1, 1, E), wmap),                      # ln1 beta[l]
                pl.BlockSpec((1, 1, E), wmap),                      # ln2 gamma[l]
                pl.BlockSpec((1, 1, E), wmap),                      # ln2 beta[l]
                pl.BlockSpec((1, E, 4 * E), wmap),                  # ff w1[l]
                pl.BlockSpec((1, 1, 4 * E), wmap),                  # ff b1[l]
                pl.BlockSpec((1, 4 * E, E), wmap),                  # ff w2[l]
                pl.BlockSpec((1, 1, E), wmap),                      # ff b2[l]
                pl.BlockSpec((1, E), cmap2),                        # ln_f gamma
                pl.BlockSpec((1, E), cmap2),                        # ln_f beta
            ],
            out_specs=pl.BlockSpec((rows_blk, E), lambda b, l: (b, 0)),  # resident across layers
            scratch_shapes=[
                pltpu.VMEM((rows_blk, E), jnp.float32),             # residual stream
                pltpu.VMEM((rows_blk, HE), jnp.float32),            # per-head outputs
            ],
        ),
        compiler_params=pltpu.CompilerParams(
            dimension_semantics=("parallel", "arbitrary"),
            vmem_limit_bytes=vmem_limit),
        cost_estimate=cost,
    )(
        x2d,
        kparams["w_qkv"], kparams["wp"], kparams["bp"],
        kparams["ln1_g"], kparams["ln1_b"], kparams["ln2_g"], kparams["ln2_b"],
        kparams["wf1"], kparams["bf1"], kparams["wf2"], kparams["bf2"],
        kparams["lnf_g"], kparams["lnf_b"],
    )
    return out2d.reshape(B, T, E)


# ----------------------------- parameter packing ------------------------------


def pack_params(params, mxu="bf16"):
    """Stack per-layer params along a leading layer dim; fuse per-head wq/wk/wv
    into one (E, 3*H*E) matrix per layer; store matmul weights in the MXU dtype.

    TODO(synk): for v5e pad the fused 3*H*E column dim to a multiple of 128.
    """
    wdt = jnp.bfloat16 if mxu == "bf16" else jnp.float32
    E = params["tok_table"].shape[-1]
    blocks = params["blocks"]

    def to2d(w):  # (H, E, E) -> (E, H*E), columns head-major
        H = w.shape[0]
        return jnp.transpose(w, (1, 0, 2)).reshape(E, H * E)

    w_qkv = jnp.stack([
        jnp.concatenate([to2d(p["wq"]), to2d(p["wk"]), to2d(p["wv"])], axis=1)
        for p in blocks])

    stack = lambda name: jnp.stack([p[name] for p in blocks])
    return {
        "tok_table": params["tok_table"],
        "pos_table": params["pos_table"],
        "lnf_g": params["lnf_g"],
        "lnf_b": params["lnf_b"],
        "w_qkv": w_qkv.astype(wdt),
        "wp": stack("wp").astype(wdt),
        "bp": stack("bp"),
        "ln1_g": stack("ln1_g"), "ln1_b": stack("ln1_b"),
        "ln2_g": stack("ln2_g"), "ln2_b": stack("ln2_b"),
        "wf1": stack("wf1").astype(wdt), "bf1": stack("bf1"),
        "wf2": stack("wf2").astype(wdt), "bf2": stack("bf2"),
    }


# ----------------------------- reference (pure JAX) ---------------------------


def _ref_forward(idx, params):
    def ln(x, g, b):
        mu = jnp.mean(x, axis=-1, keepdims=True)
        var = jnp.mean((x - mu) ** 2, axis=-1, keepdims=True)
        return (x - mu) * jax.lax.rsqrt(var + 1e-5) * g + b

    B, T = idx.shape
    x = params["tok_table"][idx] + params["pos_table"][:T][None]
    for p in params["blocks"]:
        xn = ln(x, p["ln1_g"], p["ln1_b"])
        H = p["wk"].shape[0]
        E = x.shape[-1]
        outs = []
        for h in range(H):
            k = xn @ p["wk"][h]
            q = xn @ p["wq"][h]
            v = xn @ p["wv"][h]
            att = jax.nn.softmax(q @ jnp.swapaxes(k, -2, -1) / (E ** 0.5), axis=-1)
            outs.append(att @ v)
        cat = jnp.concatenate(outs, axis=-1)
        x = x + (cat @ p["wp"] + p["bp"])
        xn2 = ln(x, p["ln2_g"], p["ln2_b"])
        h1 = jnp.maximum(xn2 @ p["wf1"] + p["bf1"], 0.0)
        x = x + (h1 @ p["wf2"] + p["bf2"])
    return ln(x, params["lnf_g"], params["lnf_b"])


# ----------------------------- parameter init ---------------------------------


def init_params(key, vocab_size, n_embd, n_head, n_layer, block_size):
    E, H = n_embd, n_head
    keys = jax.random.split(key, 2 + n_layer)
    params = {
        "tok_table": 0.02 * jax.random.normal(keys[0], (vocab_size, E), jnp.float32),
        "pos_table": 0.02 * jax.random.normal(keys[1], (block_size, E), jnp.float32),
        "lnf_g": jnp.ones((1, E), jnp.float32),
        "lnf_b": jnp.zeros((1, E), jnp.float32),
        "blocks": [],
    }
    for l in range(n_layer):
        ks = jax.random.split(keys[2 + l], 8)
        blk = {
            "wk": 0.05 * jax.random.normal(ks[0], (H, E, E), jnp.float32),
            "wq": 0.05 * jax.random.normal(ks[1], (H, E, E), jnp.float32),
            "wv": 0.05 * jax.random.normal(ks[2], (H, E, E), jnp.float32),
            "wp": 0.05 * jax.random.normal(ks[3], (H * E, E), jnp.float32),
            "bp": 0.01 * jax.random.normal(ks[4], (1, E), jnp.float32),
            "ln1_g": jnp.ones((1, E), jnp.float32),
            "ln1_b": jnp.zeros((1, E), jnp.float32),
            "ln2_g": jnp.ones((1, E), jnp.float32),
            "ln2_b": jnp.zeros((1, E), jnp.float32),
            "wf1": 0.05 * jax.random.normal(ks[5], (E, 4 * E), jnp.float32),
            "bf1": 0.01 * jax.random.normal(ks[6], (1, 4 * E), jnp.float32),
            "wf2": 0.05 * jax.random.normal(ks[7], (4 * E, E), jnp.float32),
            "bf2": jnp.zeros((1, E), jnp.float32),
        }
        params["blocks"].append(blk)
    return params


# ----------------------------- main --------------------------------------------


if __name__ == "__main__":
    vocab_size, n_embd, n_head, n_layer, block_size = 64, 32, 2, 2, 16
    B, T = 2, 8

    key = jax.random.PRNGKey(0)
    kp, ki = jax.random.split(key)
    params = init_params(kp, vocab_size, n_embd, n_head, n_layer, block_size)
    idx = jax.random.randint(ki, (B, T), 0, vocab_size, dtype=jnp.int32)

    ref = _ref_forward(idx, params)

    # f32 MXU path (f32 weights, exact softmax divide): tight numerical check.
    out_f32 = jax.block_until_ready(
        transformer_encoder(idx, pack_params(params, mxu="f32")))
    assert out_f32.shape == (B, T, n_embd)
    assert jnp.allclose(out_f32, ref, rtol=5e-3, atol=5e-3), "f32 mismatch vs reference"

    # bf16 fast path (bf16 weights in HBM, bf16 MXU operands, f32 accumulation).
    out_bf16 = jax.block_until_ready(
        transformer_encoder(idx, pack_params(params, mxu="bf16")))
    assert out_bf16.shape == (B, T, n_embd)
    assert jnp.allclose(out_bf16, ref, rtol=5e-2, atol=5e-2), "bf16 mismatch vs reference"

    print("KERNEL_OK")
</pallas_src>

<mosaic_0001>
module attributes {stable_mosaic.version = 11 : i64} {
  func.func @fused_encoder_kernel(%arg0: i32, %arg1: i32, %arg2: memref<16x32xf32, #tpu.memory_space<vmem>>, %arg3: memref<1x32x192xf32, #tpu.memory_space<vmem>>, %arg4: memref<1x64x32xf32, #tpu.memory_space<vmem>>, %arg5: memref<1x1x32xf32, #tpu.memory_space<vmem>>, %arg6: memref<1x1x32xf32, #tpu.memory_space<vmem>>, %arg7: memref<1x1x32xf32, #tpu.memory_space<vmem>>, %arg8: memref<1x1x32xf32, #tpu.memory_space<vmem>>, %arg9: memref<1x1x32xf32, #tpu.memory_space<vmem>>, %arg10: memref<1x32x128xf32, #tpu.memory_space<vmem>>, %arg11: memref<1x1x128xf32, #tpu.memory_space<vmem>>, %arg12: memref<1x128x32xf32, #tpu.memory_space<vmem>>, %arg13: memref<1x1x32xf32, #tpu.memory_space<vmem>>, %arg14: memref<1x32xf32, #tpu.memory_space<vmem>>, %arg15: memref<1x32xf32, #tpu.memory_space<vmem>>, %arg16: memref<16x32xf32, #tpu.memory_space<vmem>>, %arg17: memref<16x32xf32, #tpu.memory_space<vmem>>, %arg18: memref<16x64xf32, #tpu.memory_space<vmem>>) attributes {dimension_semantics = [#tpu.dimension_semantics<parallel>, #tpu.dimension_semantics<arbitrary>], iteration_bounds = array<i64: 1, 2>, scalar_prefetch = 0 : i64, scratch_operands = 2 : i64, tpu.core_type = #tpu.core_type<tc>, window_params = [{transform_indices = @transform_0, window_bounds = array<i64: 16, 32>}, {transform_indices = @transform_1, window_bounds = array<i64: 1, 32, 192>}, {transform_indices = @transform_2, window_bounds = array<i64: 1, 64, 32>}, {transform_indices = @transform_3, window_bounds = array<i64: 1, 1, 32>}, {transform_indices = @transform_4, window_bounds = array<i64: 1, 1, 32>}, {transform_indices = @transform_5, window_bounds = array<i64: 1, 1, 32>}, {transform_indices = @transform_6, window_bounds = array<i64: 1, 1, 32>}, {transform_indices = @transform_7, window_bounds = array<i64: 1, 1, 32>}, {transform_indices = @transform_8, window_bounds = array<i64: 1, 32, 128>}, {transform_indices = @transform_9, window_bounds = array<i64: 1, 1, 128>}, {transform_indices = @transform_10, window_bounds = array<i64: 1, 128, 32>}, {transform_indices = @transform_11, window_bounds = array<i64: 1, 1, 32>}, {pipeline_mode = #tpu.pipeline_mode<synchronous>, transform_indices = @transform_12, window_bounds = array<i64: 1, 32>}, {pipeline_mode = #tpu.pipeline_mode<synchronous>, transform_indices = @transform_13, window_bounds = array<i64: 1, 32>}, {transform_indices = @transform_14, window_bounds = array<i64: 16, 32>}]} {
    %c0_i32 = arith.constant 0 : i32
    %0 = arith.cmpi eq, %arg1, %c0_i32 : i32
    %1 = arith.extui %0 : i1 to i32
    %c0_i32_0 = arith.constant 0 : i32
    %2 = arith.cmpi ne, %1, %c0_i32_0 : i32
    scf.if %2 {
      %c0_67 = arith.constant 0 : index
      %c0_68 = arith.constant 0 : index
      %131 = vector.load %arg2[%c0_67, %c0_68] : memref<16x32xf32, #tpu.memory_space<vmem>>, vector<16x32xf32>
      %c0_69 = arith.constant 0 : index
      %c0_70 = arith.constant 0 : index
      %132 = vector.load %arg17[%c0_69, %c0_70] : memref<16x32xf32, #tpu.memory_space<vmem>>, vector<16x32xf32>
      tpu.vector_store %arg17[%c0_69, %c0_70], %131 {strides = array<i32>} : memref<16x32xf32, #tpu.memory_space<vmem>>, vector<16x32xf32>,
    } else {
    }
    %c0 = arith.constant 0 : index
    %c0_1 = arith.constant 0 : index
    %3 = vector.load %arg17[%c0, %c0_1] : memref<16x32xf32, #tpu.memory_space<vmem>>, vector<16x32xf32>
    %c0_2 = arith.constant 0 : index
    %c0_3 = arith.constant 0 : index
    %c0_4 = arith.constant 0 : index
    %4 = vector.load %arg6[%c0_2, %c0_3, %c0_4] : memref<1x1x32xf32, #tpu.memory_space<vmem>>, vector<1x1x32xf32>
    %5 = vector.shape_cast %4 : vector<1x1x32xf32> to vector<1x32xf32>
    %c0_5 = arith.constant 0 : index
    %c0_6 = arith.constant 0 : index
    %c0_7 = arith.constant 0 : index
    %6 = vector.load %arg7[%c0_5, %c0_6, %c0_7] : memref<1x1x32xf32, #tpu.memory_space<vmem>>, vector<1x1x32xf32>
    %7 = vector.shape_cast %6 : vector<1x1x32xf32> to vector<1x32xf32>
    %cst = arith.constant dense<0.000000e+00> : vector<16xf32>
    %8 = vector.multi_reduction <add>, %3, %cst [1] : vector<16x32xf32> to vector<16xf32>
    %9 = vector.shape_cast %8 : vector<16xf32> to vector<16x1xf32>
    %cst_8 = arith.constant 3.200000e+01 : f32
    %10 = vector.broadcast %cst_8 : f32 to vector<16x1xf32>
    %11 = arith.divf %9, %10 : vector<16x1xf32>
    %12 = vector.broadcast %11 : vector<16x1xf32> to vector<16x32xf32>
    %13 = arith.subf %3, %12 : vector<16x32xf32>
    %14 = arith.mulf %13, %13 : vector<16x32xf32>
    %cst_9 = arith.constant dense<0.000000e+00> : vector<16xf32>
    %15 = vector.multi_reduction <add>, %14, %cst_9 [1] : vector<16x32xf32> to vector<16xf32>
    %16 = vector.shape_cast %15 : vector<16xf32> to vector<16x1xf32>
    %cst_10 = arith.constant 3.200000e+01 : f32
    %17 = vector.broadcast %cst_10 : f32 to vector<16x1xf32>
    %18 = arith.divf %16, %17 : vector<16x1xf32>
    %19 = vector.broadcast %11 : vector<16x1xf32> to vector<16x32xf32>
    %20 = arith.subf %3, %19 : vector<16x32xf32>
    %cst_11 = arith.constant 9.99999974E-6 : f32
    %21 = vector.broadcast %cst_11 : f32 to vector<16x1xf32>
    %22 = arith.addf %18, %21 : vector<16x1xf32>
    %23 = math.rsqrt %22 : vector<16x1xf32>
    %24 = vector.broadcast %23 : vector<16x1xf32> to vector<16x32xf32>
    %25 = arith.mulf %20, %24 : vector<16x32xf32>
    %26 = vector.broadcast %5 : vector<1x32xf32> to vector<16x32xf32>
    %27 = arith.mulf %25, %26 : vector<16x32xf32>
    %28 = vector.broadcast %7 : vector<1x32xf32> to vector<16x32xf32>
    %29 = arith.addf %27, %28 : vector<16x32xf32>
    %c0_12 = arith.constant 0 : index
    %c0_13 = arith.constant 0 : index
    %c0_14 = arith.constant 0 : index
    %30 = vector.load %arg3[%c0_12, %c0_13, %c0_14] : memref<1x32x192xf32, #tpu.memory_space<vmem>>, vector<1x32x192xf32>
    %31 = vector.shape_cast %30 : vector<1x32x192xf32> to vector<32x192xf32>
    %cst_15 = arith.constant dense<0.000000e+00> : vector<16x192xf32>
    %32 = tpu.matmul %29, %31, %cst_15 {dimension_numbers = #tpu.dot_dimension_numbers<[1], [0], [0], [1], [0, 0, 1, 1], [], []>} : vector<16x32xf32>, vector<32x192xf32>, vector<16x192xf32> -> vector<16x192xf32>
    %33 = vector.extract_strided_slice %32 {offsets = [0, 0], sizes = [16, 32], strides = [1, 1]} : vector<16x192xf32> to vector<16x32xf32>
    %34 = vector.shape_cast %33 : vector<16x32xf32> to vector<2x8x32xf32>
    %35 = vector.extract_strided_slice %32 {offsets = [0, 64], sizes = [16, 32], strides = [1, 1]} : vector<16x192xf32> to vector<16x32xf32>
    %36 = vector.shape_cast %35 : vector<16x32xf32> to vector<2x8x32xf32>
    %37 = vector.extract_strided_slice %32 {offsets = [0, 128], sizes = [16, 32], strides = [1, 1]} : vector<16x192xf32> to vector<16x32xf32>
    %38 = vector.shape_cast %37 : vector<16x32xf32> to vector<2x8x32xf32>
    "tpu.trace_start"() <{level = 10 : i32, message = "bqd,bkd->bqk"}> : () -> ()
    %cst_16 = arith.constant dense<0.000000e+00> : vector<2x8x8xf32>
    %39 = tpu.matmul %34, %36, %cst_16 {dimension_numbers = #tpu.dot_dimension_numbers<[2], [2], [1], [1], [0, 0, 0, 1, 1, 1], [0], [0]>} : vector<2x8x32xf32>, vector<2x8x32xf32>, vector<2x8x8xf32> -> vector<2x8x8xf32>
    "tpu.trace_stop"() : () -> ()
    %cst_17 = arith.constant 0.176776692 : f32
    %40 = vector.broadcast %cst_17 : f32 to vector<2x8x8xf32>
    %41 = arith.mulf %39, %40 : vector<2x8x8xf32>
    %cst_18 = arith.constant dense<0xFF800000> : vector<2x8xf32>
    %42 = vector.multi_reduction <maximumf>, %41, %cst_18 [2] : vector<2x8x8xf32> to vector<2x8xf32>
    %43 = vector.shape_cast %42 : vector<2x8xf32> to vector<2x8x1xf32>
    %44 = vector.broadcast %43 : vector<2x8x1xf32> to vector<2x8x8xf32>
    %45 = arith.subf %41, %44 : vector<2x8x8xf32>
    %46 = math.exp %45 : vector<2x8x8xf32>
    %cst_19 = arith.constant dense<0.000000e+00> : vector<2x8xf32>
    %47 = vector.multi_reduction <add>, %46, %cst_19 [2] : vector<2x8x8xf32> to vector<2x8xf32>
    %48 = vector.shape_cast %47 : vector<2x8xf32> to vector<2x8x1xf32>
    %49 = vector.broadcast %48 : vector<2x8x1xf32> to vector<2x8x8xf32>
    %50 = arith.divf %46, %49 : vector<2x8x8xf32>
    "tpu.trace_start"() <{level = 10 : i32, message = "bqk,bkd->bqd"}> : () -> ()
    %cst_20 = arith.constant dense<0.000000e+00> : vector<2x8x32xf32>
    %51 = tpu.matmul %50, %38, %cst_20 {dimension_numbers = #tpu.dot_dimension_numbers<[2], [1], [1], [2], [0, 0, 0, 1, 1, 2], [0], [0]>} : vector<2x8x8xf32>, vector<2x8x32xf32>, vector<2x8x32xf32> -> vector<2x8x32xf32>
    "tpu.trace_stop"() : () -> ()
    %52 = vector.shape_cast %51 : vector<2x8x32xf32> to vector<16x32xf32>
    %c0_21 = arith.constant 0 : index
    %c0_22 = arith.constant 0 : index
    %53 = vector.load %arg18[%c0_21, %c0_22] : memref<16x64xf32, #tpu.memory_space<vmem>>, vector<16x32xf32>
    tpu.vector_store %arg18[%c0_21, %c0_22], %52 {strides = array<i32>} : memref<16x64xf32, #tpu.memory_space<vmem>>, vector<16x32xf32>,
    %54 = vector.extract_strided_slice %32 {offsets = [0, 32], sizes = [16, 32], strides = [1, 1]} : vector<16x192xf32> to vector<16x32xf32>
    %55 = vector.shape_cast %54 : vector<16x32xf32> to vector<2x8x32xf32>
    %56 = vector.extract_strided_slice %32 {offsets = [0, 96], sizes = [16, 32], strides = [1, 1]} : vector<16x192xf32> to vector<16x32xf32>
    %57 = vector.shape_cast %56 : vector<16x32xf32> to vector<2x8x32xf32>
    %58 = vector.extract_strided_slice %32 {offsets = [0, 160], sizes = [16, 32], strides = [1, 1]} : vector<16x192xf32> to vector<16x32xf32>
    %59 = vector.shape_cast %58 : vector<16x32xf32> to vector<2x8x32xf32>
    "tpu.trace_start"() <{level = 10 : i32, message = "bqd,bkd->bqk"}> : () -> ()
    %cst_23 = arith.constant dense<0.000000e+00> : vector<2x8x8xf32>
    %60 = tpu.matmul %55, %57, %cst_23 {dimension_numbers = #tpu.dot_dimension_numbers<[2], [2], [1], [1], [0, 0, 0, 1, 1, 1], [0], [0]>} : vector<2x8x32xf32>, vector<2x8x32xf32>, vector<2x8x8xf32> -> vector<2x8x8xf32>
    "tpu.trace_stop"() : () -> ()
    %cst_24 = arith.constant 0.176776692 : f32
    %61 = vector.broadcast %cst_24 : f32 to vector<2x8x8xf32>
    %62 = arith.mulf %60, %61 : vector<2x8x8xf32>
    %cst_25 = arith.constant dense<0xFF800000> : vector<2x8xf32>
    %63 = vector.multi_reduction <maximumf>, %62, %cst_25 [2] : vector<2x8x8xf32> to vector<2x8xf32>
    %64 = vector.shape_cast %63 : vector<2x8xf32> to vector<2x8x1xf32>
    %65 = vector.broadcast %64 : vector<2x8x1xf32> to vector<2x8x8xf32>
    %66 = arith.subf %62, %65 : vector<2x8x8xf32>
    %67 = math.exp %66 : vector<2x8x8xf32>
    %cst_26 = arith.constant dense<0.000000e+00> : vector<2x8xf32>
    %68 = vector.multi_reduction <add>, %67, %cst_26 [2] : vector<2x8x8xf32> to vector<2x8xf32>
    %69 = vector.shape_cast %68 : vector<2x8xf32> to vector<2x8x1xf32>
    %70 = vector.broadcast %69 : vector<2x8x1xf32> to vector<2x8x8xf32>
    %71 = arith.divf %67, %70 : vector<2x8x8xf32>
    "tpu.trace_start"() <{level = 10 : i32, message = "bqk,bkd->bqd"}> : () -> ()
    %cst_27 = arith.constant dense<0.000000e+00> : vector<2x8x32xf32>
    %72 = tpu.matmul %71, %59, %cst_27 {dimension_numbers = #tpu.dot_dimension_numbers<[2], [1], [1], [2], [0, 0, 0, 1, 1, 2], [0], [0]>} : vector<2x8x8xf32>, vector<2x8x32xf32>, vector<2x8x32xf32> -> vector<2x8x32xf32>
    "tpu.trace_stop"() : () -> ()
    %73 = vector.shape_cast %72 : vector<2x8x32xf32> to vector<16x32xf32>
    %c0_28 = arith.constant 0 : index
    %c32 = arith.constant 32 : index
    %74 = vector.load %arg18[%c0_28, %c32] : memref<16x64xf32, #tpu.memory_space<vmem>>, vector<16x32xf32>
    tpu.vector_store %arg18[%c0_28, %c32], %73 {strides = array<i32>} : memref<16x64xf32, #tpu.memory_space<vmem>>, vector<16x32xf32>,
    %c0_29 = arith.constant 0 : index
    %c0_30 = arith.constant 0 : index
    %75 = vector.load %arg18[%c0_29, %c0_30] : memref<16x64xf32, #tpu.memory_space<vmem>>, vector<16x64xf32>
    %c0_31 = arith.constant 0 : index
    %c0_32 = arith.constant 0 : index
    %c0_33 = arith.constant 0 : index
    %76 = vector.load %arg4[%c0_31, %c0_32, %c0_33] : memref<1x64x32xf32, #tpu.memory_space<vmem>>, vector<1x64x32xf32>
    %77 = vector.shape_cast %76 : vector<1x64x32xf32> to vector<64x32xf32>
    %cst_34 = arith.constant dense<0.000000e+00> : vector<16x32xf32>
    %78 = tpu.matmul %75, %77, %cst_34 {dimension_numbers = #tpu.dot_dimension_numbers<[1], [0], [0], [1], [0, 0, 1, 1], [], []>} : vector<16x64xf32>, vector<64x32xf32>, vector<16x32xf32> -> vector<16x32xf32>
    %c0_35 = arith.constant 0 : index
    %c0_36 = arith.constant 0 : index
    %c0_37 = arith.constant 0 : index
    %79 = vector.load %arg5[%c0_35, %c0_36, %c0_37] : memref<1x1x32xf32, #tpu.memory_space<vmem>>, vector<1x1x32xf32>
    %80 = vector.shape_cast %79 : vector<1x1x32xf32> to vector<1x32xf32>
    %81 = vector.broadcast %80 : vector<1x32xf32> to vector<16x32xf32>
    %82 = arith.addf %78, %81 : vector<16x32xf32>
    %83 = arith.addf %3, %82 : vector<16x32xf32>
    %c0_38 = arith.constant 0 : index
    %c0_39 = arith.constant 0 : index
    %c0_40 = arith.constant 0 : index
    %84 = vector.load %arg8[%c0_38, %c0_39, %c0_40] : memref<1x1x32xf32, #tpu.memory_space<vmem>>, vector<1x1x32xf32>
    %85 = vector.shape_cast %84 : vector<1x1x32xf32> to vector<1x32xf32>
    %c0_41 = arith.constant 0 : index
    %c0_42 = arith.constant 0 : index
    %c0_43 = arith.constant 0 : index
    %86 = vector.load %arg9[%c0_41, %c0_42, %c0_43] : memref<1x1x32xf32, #tpu.memory_space<vmem>>, vector<1x1x32xf32>
    %87 = vector.shape_cast %86 : vector<1x1x32xf32> to vector<1x32xf32>
    %cst_44 = arith.constant dense<0.000000e+00> : vector<16xf32>
    %88 = vector.multi_reduction <add>, %83, %cst_44 [1] : vector<16x32xf32> to vector<16xf32>
    %89 = vector.shape_cast %88 : vector<16xf32> to vector<16x1xf32>
    %cst_45 = arith.constant 3.200000e+01 : f32
    %90 = vector.broadcast %cst_45 : f32 to vector<16x1xf32>
    %91 = arith.divf %89, %90 : vector<16x1xf32>
    %92 = vector.broadcast %91 : vector<16x1xf32> to vector<16x32xf32>
    %93 = arith.subf %83, %92 : vector<16x32xf32>
    %94 = arith.mulf %93, %93 : vector<16x32xf32>
    %cst_46 = arith.constant dense<0.000000e+00> : vector<16xf32>
    %95 = vector.multi_reduction <add>, %94, %cst_46 [1] : vector<16x32xf32> to vector<16xf32>
    %96 = vector.shape_cast %95 : vector<16xf32> to vector<16x1xf32>
    %cst_47 = arith.constant 3.200000e+01 : f32
    %97 = vector.broadcast %cst_47 : f32 to vector<16x1xf32>
    %98 = arith.divf %96, %97 : vector<16x1xf32>
    %99 = vector.broadcast %91 : vector<16x1xf32> to vector<16x32xf32>
    %100 = arith.subf %83, %99 : vector<16x32xf32>
    %cst_48 = arith.constant 9.99999974E-6 : f32
    %101 = vector.broadcast %cst_48 : f32 to vector<16x1xf32>
    %102 = arith.addf %98, %101 : vector<16x1xf32>
    %103 = math.rsqrt %102 : vector<16x1xf32>
    %104 = vector.broadcast %103 : vector<16x1xf32> to vector<16x32xf32>
    %105 = arith.mulf %100, %104 : vector<16x32xf32>
    %106 = vector.broadcast %85 : vector<1x32xf32> to vector<16x32xf32>
    %107 = arith.mulf %105, %106 : vector<16x32xf32>
    %108 = vector.broadcast %87 : vector<1x32xf32> to vector<16x32xf32>
    %109 = arith.addf %107, %108 : vector<16x32xf32>
    %c0_49 = arith.constant 0 : index
    %c0_50 = arith.constant 0 : index
    %c0_51 = arith.constant 0 : index
    %110 = vector.load %arg10[%c0_49, %c0_50, %c0_51] : memref<1x32x128xf32, #tpu.memory_space<vmem>>, vector<1x32x128xf32>
    %111 = vector.shape_cast %110 : vector<1x32x128xf32> to vector<32x128xf32>
    %cst_52 = arith.constant dense<0.000000e+00> : vector<16x128xf32>
    %112 = tpu.matmul %109, %111, %cst_52 {dimension_numbers = #tpu.dot_dimension_numbers<[1], [0], [0], [1], [0, 0, 1, 1], [], []>} : vector<16x32xf32>, vector<32x128xf32>, vector<16x128xf32> -> vector<16x128xf32>
    %c0_53 = arith.constant 0 : index
    %c0_54 = arith.constant 0 : index
    %c0_55 = arith.constant 0 : index
    %113 = vector.load %arg11[%c0_53, %c0_54, %c0_55] : memref<1x1x128xf32, #tpu.memory_space<vmem>>, vector<1x1x128xf32>
    %114 = vector.shape_cast %113 : vector<1x1x128xf32> to vector<1x128xf32>
    %115 = vector.broadcast %114 : vector<1x128xf32> to vector<16x128xf32>
    %116 = arith.addf %112, %115 : vector<16x128xf32>
    %cst_56 = arith.constant 0.000000e+00 : f32
    %117 = vector.broadcast %cst_56 : f32 to vector<16x128xf32>
    %118 = arith.maximumf %116, %117 : vector<16x128xf32>
    %c0_57 = arith.constant 0 : index
    %c0_58 = arith.constant 0 : index
    %c0_59 = arith.constant 0 : index
    %119 = vector.load %arg12[%c0_57, %c0_58, %c0_59] : memref<1x128x32xf32, #tpu.memory_space<vmem>>, vector<1x128x32xf32>
    %120 = vector.shape_cast %119 : vector<1x128x32xf32> to vector<128x32xf32>
    %cst_60 = arith.constant dense<0.000000e+00> : vector<16x32xf32>
    %121 = tpu.matmul %118, %120, %cst_60 {dimension_numbers = #tpu.dot_dimension_numbers<[1], [0], [0], [1], [0, 0, 1, 1], [], []>} : vector<16x128xf32>, vector<128x32xf32>, vector<16x32xf32> -> vector<16x32xf32>
    %c0_61 = arith.constant 0 : index
    %c0_62 = arith.constant 0 : index
    %c0_63 = arith.constant 0 : index
    %122 = vector.load %arg13[%c0_61, %c0_62, %c0_63] : memref<1x1x32xf32, #tpu.memory_space<vmem>>, vector<1x1x32xf32>
    %123 = vector.shape_cast %122 : vector<1x1x32xf32> to vector<1x32xf32>
    %124 = vector.broadcast %123 : vector<1x32xf32> to vector<16x32xf32>
    %125 = arith.addf %121, %124 : vector<16x32xf32>
    %126 = arith.addf %83, %125 : vector<16x32xf32>
    %c0_64 = arith.constant 0 : index
    %c0_65 = arith.constant 0 : index
    %127 = vector.load %arg17[%c0_64, %c0_65] : memref<16x32xf32, #tpu.memory_space<vmem>>, vector<16x32xf32>
    tpu.vector_store %arg17[%c0_64, %c0_65], %126 {strides = array<i32>} : memref<16x32xf32, #tpu.memory_space<vmem>>, vector<16x32xf32>,
    %c1_i32 = arith.constant 1 : i32
    %128 = arith.cmpi eq, %arg1, %c1_i32 : i32
    %129 = arith.extui %128 : i1 to i32
    %c0_i32_66 = arith.constant 0 : i32
    %130 = arith.cmpi ne, %129, %c0_i32_66 : i32
    scf.if %130 {
      %c0_67 = arith.constant 0 : index
      %c0_68 = arith.constant 0 : index
      %131 = vector.load %arg14[%c0_67, %c0_68] : memref<1x32xf32, #tpu.memory_space<vmem>>, vector<1x32xf32>
      %c0_69 = arith.constant 0 : index
      %c0_70 = arith.constant 0 : index
      %132 = vector.load %arg15[%c0_69, %c0_70] : memref<1x32xf32, #tpu.memory_space<vmem>>, vector<1x32xf32>
      %cst_71 = arith.constant dense<0.000000e+00> : vector<16xf32>
      %133 = vector.multi_reduction <add>, %126, %cst_71 [1] : vector<16x32xf32> to vector<16xf32>
      %134 = vector.shape_cast %133 : vector<16xf32> to vector<16x1xf32>
      %cst_72 = arith.constant 3.200000e+01 : f32
      %135 = vector.broadcast %cst_72 : f32 to vector<16x1xf32>
      %136 = arith.divf %134, %135 : vector<16x1xf32>
      %137 = vector.broadcast %136 : vector<16x1xf32> to vector<16x32xf32>
      %138 = arith.subf %126, %137 : vector<16x32xf32>
      %139 = arith.mulf %138, %138 : vector<16x32xf32>
      %cst_73 = arith.constant dense<0.000000e+00> : vector<16xf32>
      %140 = vector.multi_reduction <add>, %139, %cst_73 [1] : vector<16x32xf32> to vector<16xf32>
      %141 = vector.shape_cast %140 : vector<16xf32> to vector<16x1xf32>
      %cst_74 = arith.constant 3.200000e+01 : f32
      %142 = vector.broadcast %cst_74 : f32 to vector<16x1xf32>
      %143 = arith.divf %141, %142 : vector<16x1xf32>
      %144 = vector.broadcast %136 : vector<16x1xf32> to vector<16x32xf32>
      %145 = arith.subf %126, %144 : vector<16x32xf32>
      %cst_75 = arith.constant 9.99999974E-6 : f32
      %146 = vector.broadcast %cst_75 : f32 to vector<16x1xf32>
      %147 = arith.addf %143, %146 : vector<16x1xf32>
      %148 = math.rsqrt %147 : vector<16x1xf32>
      %149 = vector.broadcast %148 : vector<16x1xf32> to vector<16x32xf32>
      %150 = arith.mulf %145, %149 : vector<16x32xf32>
      %151 = vector.broadcast %131 : vector<1x32xf32> to vector<16x32xf32>
      %152 = arith.mulf %150, %151 : vector<16x32xf32>
      %153 = vector.broadcast %132 : vector<1x32xf32> to vector<16x32xf32>
      %154 = arith.addf %152, %153 : vector<16x32xf32>
      %c0_76 = arith.constant 0 : index
      %c0_77 = arith.constant 0 : index
      %155 = vector.load %arg16[%c0_76, %c0_77] : memref<16x32xf32, #tpu.memory_space<vmem>>, vector<16x32xf32>
      tpu.vector_store %arg16[%c0_76, %c0_77], %154 {strides = array<i32>} : memref<16x32xf32, #tpu.memory_space<vmem>>, vector<16x32xf32>,
    } else {
    }
    return
  }
  func.func @transform_0(%arg0: i32, %arg1: i32) -> (i32, i32) {
    %c0_i32 = arith.constant 0 : i32
    %c0_i32_0 = arith.constant 0 : i32
    return %arg0, %c0_i32 : i32, i32
  }
  func.func @transform_1(%arg0: i32, %arg1: i32) -> (i32, i32, i32) {
    %c0_i32 = arith.constant 0 : i32
    %c0_i32_0 = arith.constant 0 : i32
    %c0_i32_1 = arith.constant 0 : i32
    return %arg1, %c0_i32, %c0_i32_0 : i32, i32, i32
  }
  func.func @transform_2(%arg0: i32, %arg1: i32) -> (i32, i32, i32) {
    %c0_i32 = arith.constant 0 : i32
    %c0_i32_0 = arith.constant 0 : i32
    %c0_i32_1 = arith.constant 0 : i32
    return %arg1, %c0_i32, %c0_i32_0 : i32, i32, i32
  }
  func.func @transform_3(%arg0: i32, %arg1: i32) -> (i32, i32, i32) {
    %c0_i32 = arith.constant 0 : i32
    %c0_i32_0 = arith.constant 0 : i32
    %c0_i32_1 = arith.constant 0 : i32
    return %arg1, %c0_i32, %c0_i32_0 : i32, i32, i32
  }
  func.func @transform_4(%arg0: i32, %arg1: i32) -> (i32, i32, i32) {
    %c0_i32 = arith.constant 0 : i32
    %c0_i32_0 = arith.constant 0 : i32
    %c0_i32_1 = arith.constant 0 : i32
    return %arg1, %c0_i32, %c0_i32_0 : i32, i32, i32
  }
  func.func @transform_5(%arg0: i32, %arg1: i32) -> (i32, i32, i32) {
    %c0_i32 = arith.constant 0 : i32
    %c0_i32_0 = arith.constant 0 : i32
    %c0_i32_1 = arith.constant 0 : i32
    return %arg1, %c0_i32, %c0_i32_0 : i32, i32, i32
  }
  func.func @transform_6(%arg0: i32, %arg1: i32) -> (i32, i32, i32) {
    %c0_i32 = arith.constant 0 : i32
    %c0_i32_0 = arith.constant 0 : i32
    %c0_i32_1 = arith.constant 0 : i32
    return %arg1, %c0_i32, %c0_i32_0 : i32, i32, i32
  }
  func.func @transform_7(%arg0: i32, %arg1: i32) -> (i32, i32, i32) {
    %c0_i32 = arith.constant 0 : i32
    %c0_i32_0 = arith.constant 0 : i32
    %c0_i32_1 = arith.constant 0 : i32
    return %arg1, %c0_i32, %c0_i32_0 : i32, i32, i32
  }
  func.func @transform_8(%arg0: i32, %arg1: i32) -> (i32, i32, i32) {
    %c0_i32 = arith.constant 0 : i32
    %c0_i32_0 = arith.constant 0 : i32
    %c0_i32_1 = arith.constant 0 : i32
    return %arg1, %c0_i32, %c0_i32_0 : i32, i32, i32
  }
  func.func @transform_9(%arg0: i32, %arg1: i32) -> (i32, i32, i32) {
    %c0_i32 = arith.constant 0 : i32
    %c0_i32_0 = arith.constant 0 : i32
    %c0_i32_1 = arith.constant 0 : i32
    return %arg1, %c0_i32, %c0_i32_0 : i32, i32, i32
  }
  func.func @transform_10(%arg0: i32, %arg1: i32) -> (i32, i32, i32) {
    %c0_i32 = arith.constant 0 : i32
    %c0_i32_0 = arith.constant 0 : i32
    %c0_i32_1 = arith.constant 0 : i32
    return %arg1, %c0_i32, %c0_i32_0 : i32, i32, i32
  }
  func.func @transform_11(%arg0: i32, %arg1: i32) -> (i32, i32, i32) {
    %c0_i32 = arith.constant 0 : i32
    %c0_i32_0 = arith.constant 0 : i32
    %c0_i32_1 = arith.constant 0 : i32
    return %arg1, %c0_i32, %c0_i32_0 : i32, i32, i32
  }
  func.func @transform_12(%arg0: i32, %arg1: i32) -> (i32, i32) {
    %c0_i32 = arith.constant 0 : i32
    %c0_i32_0 = arith.constant 0 : i32
    %c0_i32_1 = arith.constant 0 : i32
    return %c0_i32, %c0_i32_0 : i32, i32
  }
  func.func @transform_13(%arg0: i32, %arg1: i32) -> (i32, i32) {
    %c0_i32 = arith.constant 0 : i32
    %c0_i32_0 = arith.constant 0 : i32
    %c0_i32_1 = arith.constant 0 : i32
    return %c0_i32, %c0_i32_0 : i32, i32
  }
  func.func @transform_14(%arg0: i32, %arg1: i32) -> (i32, i32) {
    %c0_i32 = arith.constant 0 : i32
    %c0_i32_0 = arith.constant 0 : i32
    return %arg0, %c0_i32 : i32, i32
  }
}

</mosaic_0001>

<llo_original>
// kernel: transformer_encoder.1
$region0: #{transformer_encoder.1}
  #allocation0 [shape = 'u32[]', space=smem, size = 0x4, offset = 0x4, fixed_abs, tag = 'smem constant byte address 0x4 - core index']
  #allocation1 [shape = 'u32[144,128]{1,0:T(1,128)}', space=vmem, size = 0x12000, scoped, tag = 'internal scratch']
  #allocation2 [shape = 'f32[16,32]{1,0:T(8,128)}', space=vmem, size = 0x2000, scoped, tag = 'scratch operand']
  #allocation3 [shape = 'f32[16,64]{1,0:T(8,128)}', space=vmem, size = 0x2000, scoped, tag = 'scratch operand']
  %s0 = inlined_call_operand.vmem [shape: f32[16,32], index: 0, kind: input, shape index: {}]
  %s1 = inlined_call_operand.vmem [shape: f32[2,32,192], index: 1, kind: input, shape index: {}]
  %s2 = inlined_call_operand.vmem [shape: f32[2,64,32], index: 2, kind: input, shape index: {}]
  %s3 = inlined_call_operand.vmem [shape: f32[2,1,32], index: 3, kind: input, shape index: {}]
  %s4 = inlined_call_operand.vmem [shape: f32[2,1,32], index: 4, kind: input, shape index: {}]
  %s5 = inlined_call_operand.vmem [shape: f32[2,1,32], index: 5, kind: input, shape index: {}]
  %s6 = inlined_call_operand.vmem [shape: f32[2,1,32], index: 6, kind: input, shape index: {}]
  %s7 = inlined_call_operand.vmem [shape: f32[2,1,32], index: 7, kind: input, shape index: {}]
  %s8 = inlined_call_operand.vmem [shape: f32[2,32,128], index: 8, kind: input, shape index: {}]
  %s9 = inlined_call_operand.vmem [shape: f32[2,1,128], index: 9, kind: input, shape index: {}]
  %s10 = inlined_call_operand.vmem [shape: f32[2,128,32], index: 10, kind: input, shape index: {}]
  %s11 = inlined_call_operand.vmem [shape: f32[2,1,32], index: 11, kind: input, shape index: {}]
  %s12 = inlined_call_operand.vmem [shape: f32[1,32], index: 12, kind: input, shape index: {}]
  %s13 = inlined_call_operand.vmem [shape: f32[1,32], index: 13, kind: input, shape index: {}]
  %s14 = inlined_call_operand.hbm [shape: f32[16,32], index: 14, kind: output, shape index: {}]
  %s15 = sld [smem:[#allocation0]]
  $region97: #{transformer_encoder.1} parent=0
    _
  %s17 = ssub.s32 1, %s15
  %s18 = scalar_select 0, %s17, %s15
  $region1: #{transformer_encoder.1} parent=0
    #allocation4 [shape = 'u8[8192]{0}', space=vmem, size = 0x2000, scoped, tag = 'output window, operand 0, single buffered']
    #allocation5 [shape = 's32[2]{0}', space=sflag, size = 0x8, scoped, tag = 'scoped memory for transformer_encoder.1']
    %19 = vsyncpa [#allocation5], 0
    loop: start=0, step=1, limit=4
    $region2: #{transformer_encoder.1} parent=1 // loop_pre_header
      _
    $region3: #{transformer_encoder.1} parent=1 // loop_header
      %s21 = sphi 0, %s25
      %p22 = scmp.ge.s32.totalorder %s21, 4
      %s28 = sphi 0, %s40
      %s29 = sphi 0, %s36
      %s30 = sphi 0, %s28
      %s31 = sphi 0, %s29
      %s32 = sphi 0, %s30
      %s33 = sphi 0, %s31
      %s43 = sphi 0, %s45
      %s46 = sphi 0, %s43
      %s47 = sphi 0, %s46
      %s63 = sphi 0, %s47
      %s69 = sphi 0, %s71
      %s72 = sphi 0, %s69
      %s73 = sphi 0, %s72
      %s89 = sphi 0, %s73
      %s95 = sphi 0, %s97
      %s98 = sphi 0, %s95
      %s99 = sphi 0, %s98
      %s115 = sphi 0, %s99
      %s121 = sphi 0, %s123
      %s124 = sphi 0, %s121
      %s125 = sphi 0, %s124
      %s141 = sphi 0, %s125
      %s147 = sphi 0, %s149
      %s150 = sphi 0, %s147
      %s151 = sphi 0, %s150
      %s167 = sphi 0, %s151
      %s173 = sphi 0, %s175
      %s176 = sphi 0, %s173
      %s177 = sphi 0, %s176
      %s193 = sphi 0, %s177
      %s199 = sphi 0, %s201
      %s202 = sphi 0, %s199
      %s203 = sphi 0, %s202
      %s219 = sphi 0, %s203
      %s225 = sphi 0, %s227
      %s228 = sphi 0, %s225
      %s229 = sphi 0, %s228
      %s245 = sphi 0, %s229
      %s251 = sphi 0, %s253
      %s254 = sphi 0, %s251
      %s255 = sphi 0, %s254
      %s271 = sphi 0, %s255
      %s277 = sphi 0, %s279
      %s280 = sphi 0, %s277
      %s281 = sphi 0, %s280
      %s297 = sphi 0, %s281
      %s303 = sphi 0, %s305
      %s306 = sphi 0, %s303
      %s307 = sphi 0, %s306
      %s323 = sphi 0, %s307
      %s329 = sphi 0, %s331
      %s332 = sphi 0, %s329
      %s333 = sphi 0, %s332
      %s349 = sphi 0, %s333
      %s353 = sphi 0, %s353
      %s355 = sphi 0, %s353
      %s356 = sphi 0, %s355
      %s370 = sphi 0, %s356
      %s374 = sphi 0, %s374
      %s376 = sphi 0, %s374
      %s377 = sphi 0, %s376
      %s391 = sphi 0, %s377
      %s397 = sphi 0, %s399
      %s400 = sphi 0, %s397
      %s401 = sphi 0, %s400
      %s417 = sphi 0, %s401
    $region4: #{transformer_encoder.1} parent=1 // loop_header_branch
      %24 = sbr.rel (%p22) target = $region8
    $region5: #{transformer_encoder.1} parent=1 // loop_body
      %s26 = ssub.s32 %s21, 1
      %s27 = ssub.s32 %s21, 2
      %s34 = sadd.s32 1, %s29
      %p35 = scmp.ge.s32.totalorder %s34, 2
      %s36 = scalar_select %p35, 0, %s34
      %s37 = sadd.s32 1, %s28
      %s38 = scalar_select %p35, %s37, %s28
      %p39 = scmp.ge.s32.totalorder %s38, 1
      %s40 = scalar_select %p39, 0, %s38
      %s41 = ssub.s32 %s28, %s40
      %p42 = scmp.eq.s32.totalorder %s41, 0
      %s44 = sadd.s32 %s43, 1
      %s45 = scalar_select %p42, %s43, %s44
      %p48 = pneg %p42
      %p49 = scmp.eq.s32.totalorder %s21, 1
      %p50 = por %p48, %p49
      %p51 = scmp.ne.s32.totalorder %s43, %s46
      %p52 = scmp.eq.s32.totalorder %s21, 0
      %p53 = por %p51, %p52
      %p54 = scmp.ne.s32.totalorder %s43, %s46
      %p55 = scmp.eq.s32.totalorder %s26, 1
      %p56 = por %p54, %p55
      %p57 = scmp.ne.s32.totalorder %s46, %s47
      %p58 = scmp.eq.s32.totalorder %s26, 0
      %p59 = por %p57, %p58
      %p60 = scmp.ne.s32.totalorder %s46, %s47
      %p61 = scmp.eq.s32.totalorder %s27, 1
      %p62 = por %p60, %p61
      %p64 = scmp.ne.s32.totalorder %s47, %s63
      %p65 = scmp.eq.s32.totalorder %s27, 0
      %p66 = por %p64, %p65
      %s67 = ssub.s32 %s29, %s36
      %p68 = scmp.eq.s32.totalorder %s67, 0
      %s70 = sadd.s32 %s69, 1
      %s71 = scalar_select %p68, %s69, %s70
      %p74 = pneg %p68
      %p75 = scmp.eq.s32.totalorder %s21, 1
      %p76 = por %p74, %p75
      %p77 = scmp.ne.s32.totalorder %s69, %s72
      %p78 = scmp.eq.s32.totalorder %s21, 0
      %p79 = por %p77, %p78
      %p80 = scmp.ne.s32.totalorder %s69, %s72
      %p81 = scmp.eq.s32.totalorder %s26, 1
      %p82 = por %p80, %p81
      %p83 = scmp.ne.s32.totalorder %s72, %s73
      %p84 = scmp.eq.s32.totalorder %s26, 0
      %p85 = por %p83, %p84
      %p86 = scmp.ne.s32.totalorder %s72, %s73
      %p87 = scmp.eq.s32.totalorder %s27, 1
      %p88 = por %p86, %p87
      %p90 = scmp.ne.s32.totalorder %s73, %s89
      %p91 = scmp.eq.s32.totalorder %s27, 0
      %p92 = por %p90, %p91
      %s93 = ssub.s32 %s29, %s36
      %p94 = scmp.eq.s32.totalorder %s93, 0
      %s96 = sadd.s32 %s95, 1
      %s97 = scalar_select %p94, %s95, %s96
      %p100 = pneg %p94
      %p101 = scmp.eq.s32.totalorder %s21, 1
      %p102 = por %p100, %p101
      %p103 = scmp.ne.s32.totalorder %s95, %s98
      %p104 = scmp.eq.s32.totalorder %s21, 0
      %p105 = por %p103, %p104
      %p106 = scmp.ne.s32.totalorder %s95, %s98
      %p107 = scmp.eq.s32.totalorder %s26, 1
      %p108 = por %p106, %p107
      %p109 = scmp.ne.s32.totalorder %s98, %s99
      %p110 = scmp.eq.s32.totalorder %s26, 0
      %p111 = por %p109, %p110
      %p112 = scmp.ne.s32.totalorder %s98, %s99
      %p113 = scmp.eq.s32.totalorder %s27, 1
      %p114 = por %p112, %p113
      %p116 = scmp.ne.s32.totalorder %s99, %s115
      %p117 = scmp.eq.s32.totalorder %s27, 0
      %p118 = por %p116, %p117
      %s119 = ssub.s32 %s29, %s36
      %p120 = scmp.eq.s32.totalorder %s119, 0
      %s122 = sadd.s32 %s121, 1
      %s123 = scalar_select %p120, %s121, %s122
      %p126 = pneg %p120
      %p127 = scmp.eq.s32.totalorder %s21, 1
      %p128 = por %p126, %p127
      %p129 = scmp.ne.s32.totalorder %s121, %s124
      %p130 = scmp.eq.s32.totalorder %s21, 0
      %p131 = por %p129, %p130
      %p132 = scmp.ne.s32.totalorder %s121, %s124
      %p133 = scmp.eq.s32.totalorder %s26, 1
      %p134 = por %p132, %p133
      %p135 = scmp.ne.s32.totalorder %s124, %s125
      %p136 = scmp.eq.s32.totalorder %s26, 0
      %p137 = por %p135, %p136
      %p138 = scmp.ne.s32.totalorder %s124, %s125
      %p139 = scmp.eq.s32.totalorder %s27, 1
      %p140 = por %p138, %p139
      %p142 = scmp.ne.s32.totalorder %s125, %s141
      %p143 = scmp.eq.s32.totalorder %s27, 0
      %p144 = por %p142, %p143
      %s145 = ssub.s32 %s29, %s36
      %p146 = scmp.eq.s32.totalorder %s145, 0
      %s148 = sadd.s32 %s147, 1
      %s149 = scalar_select %p146, %s147, %s148
      %p152 = pneg %p146
      %p153 = scmp.eq.s32.totalorder %s21, 1
      %p154 = por %p152, %p153
      %p155 = scmp.ne.s32.totalorder %s147, %s150
      %p156 = scmp.eq.s32.totalorder %s21, 0
      %p157 = por %p155, %p156
      %p158 = scmp.ne.s32.totalorder %s147, %s150
      %p159 = scmp.eq.s32.totalorder %s26, 1
      %p160 = por %p158, %p159
      %p161 = scmp.ne.s32.totalorder %s150, %s151
      %p162 = scmp.eq.s32.totalorder %s26, 0
      %p163 = por %p161, %p162
      %p164 = scmp.ne.s32.totalorder %s150, %s151
      %p165 = scmp.eq.s32.totalorder %s27, 1
      %p166 = por %p164, %p165
      %p168 = scmp.ne.s32.totalorder %s151, %s167
      %p169 = scmp.eq.s32.totalorder %s27, 0
      %p170 = por %p168, %p169
      %s171 = ssub.s32 %s29, %s36
      %p172 = scmp.eq.s32.totalorder %s171, 0
      %s174 = sadd.s32 %s173, 1
      %s175 = scalar_select %p172, %s173, %s174
      %p178 = pneg %p172
      %p179 = scmp.eq.s32.totalorder %s21, 1
      %p180 = por %p178, %p179
      %p181 = scmp.ne.s32.totalorder %s173, %s176
      %p182 = scmp.eq.s32.totalorder %s21, 0
      %p183 = por %p181, %p182
      %p184 = scmp.ne.s32.totalorder %s173, %s176
      %p185 = scmp.eq.s32.totalorder %s26, 1
      %p186 = por %p184, %p185
      %p187 = scmp.ne.s32.totalorder %s176, %s177
      %p188 = scmp.eq.s32.totalorder %s26, 0
      %p189 = por %p187, %p188
      %p190 = scmp.ne.s32.totalorder %s176, %s177
      %p191 = scmp.eq.s32.totalorder %s27, 1
      %p192 = por %p190, %p191
      %p194 = scmp.ne.s32.totalorder %s177, %s193
      %p195 = scmp.eq.s32.totalorder %s27, 0
      %p196 = por %p194, %p195
      %s197 = ssub.s32 %s29, %s36
      %p198 = scmp.eq.s32.totalorder %s197, 0
      %s200 = sadd.s32 %s199, 1
      %s201 = scalar_select %p198, %s199, %s200
      %p204 = pneg %p198
      %p205 = scmp.eq.s32.totalorder %s21, 1
      %p206 = por %p204, %p205
      %p207 = scmp.ne.s32.totalorder %s199, %s202
      %p208 = scmp.eq.s32.totalorder %s21, 0
      %p209 = por %p207, %p208
      %p210 = scmp.ne.s32.totalorder %s199, %s202
      %p211 = scmp.eq.s32.totalorder %s26, 1
      %p212 = por %p210, %p211
      %p213 = scmp.ne.s32.totalorder %s202, %s203
      %p214 = scmp.eq.s32.totalorder %s26, 0
      %p215 = por %p213, %p214
      %p216 = scmp.ne.s32.totalorder %s202, %s203
      %p217 = scmp.eq.s32.totalorder %s27, 1
      %p218 = por %p216, %p217
      %p220 = scmp.ne.s32.totalorder %s203, %s219
      %p221 = scmp.eq.s32.totalorder %s27, 0
      %p222 = por %p220, %p221
      %s223 = ssub.s32 %s29, %s36
      %p224 = scmp.eq.s32.totalorder %s223, 0
      %s226 = sadd.s32 %s225, 1
      %s227 = scalar_select %p224, %s225, %s226
      %p230 = pneg %p224
      %p231 = scmp.eq.s32.totalorder %s21, 1
      %p232 = por %p230, %p231
      %p233 = scmp.ne.s32.totalorder %s225, %s228
      %p234 = scmp.eq.s32.totalorder %s21, 0
      %p235 = por %p233, %p234
      %p236 = scmp.ne.s32.totalorder %s225, %s228
      %p237 = scmp.eq.s32.totalorder %s26, 1
      %p238 = por %p236, %p237
      %p239 = scmp.ne.s32.totalorder %s228, %s229
      %p240 = scmp.eq.s32.totalorder %s26, 0
      %p241 = por %p239, %p240
      %p242 = scmp.ne.s32.totalorder %s228, %s229
      %p243 = scmp.eq.s32.totalorder %s27, 1
      %p244 = por %p242, %p243
      %p246 = scmp.ne.s32.totalorder %s229, %s245
      %p247 = scmp.eq.s32.totalorder %s27, 0
      %p248 = por %p246, %p247
      %s249 = ssub.s32 %s29, %s36
      %p250 = scmp.eq.s32.totalorder %s249, 0
      %s252 = sadd.s32 %s251, 1
      %s253 = scalar_select %p250, %s251, %s252
      %p256 = pneg %p250
      %p257 = scmp.eq.s32.totalorder %s21, 1
      %p258 = por %p256, %p257
      %p259 = scmp.ne.s32.totalorder %s251, %s254
      %p260 = scmp.eq.s32.totalorder %s21, 0
      %p261 = por %p259, %p260
      %p262 = scmp.ne.s32.totalorder %s251, %s254
      %p263 = scmp.eq.s32.totalorder %s26, 1
      %p264 = por %p262, %p263
      %p265 = scmp.ne.s32.totalorder %s254, %s255
      %p266 = scmp.eq.s32.totalorder %s26, 0
      %p267 = por %p265, %p266
      %p268 = scmp.ne.s32.totalorder %s254, %s255
      %p269 = scmp.eq.s32.totalorder %s27, 1
      %p270 = por %p268, %p269
      %p272 = scmp.ne.s32.totalorder %s255, %s271
      %p273 = scmp.eq.s32.totalorder %s27, 0
      %p274 = por %p272, %p273
      %s275 = ssub.s32 %s29, %s36
      %p276 = scmp.eq.s32.totalorder %s275, 0
      %s278 = sadd.s32 %s277, 1
      %s279 = scalar_select %p276, %s277, %s278
      %p282 = pneg %p276
      %p283 = scmp.eq.s32.totalorder %s21, 1
      %p284 = por %p282, %p283
      %p285 = scmp.ne.s32.totalorder %s277, %s280
      %p286 = scmp.eq.s32.totalorder %s21, 0
      %p287 = por %p285, %p286
      %p288 = scmp.ne.s32.totalorder %s277, %s280
      %p289 = scmp.eq.s32.totalorder %s26, 1
      %p290 = por %p288, %p289
      %p291 = scmp.ne.s32.totalorder %s280, %s281
      %p292 = scmp.eq.s32.totalorder %s26, 0
      %p293 = por %p291, %p292
      %p294 = scmp.ne.s32.totalorder %s280, %s281
      %p295 = scmp.eq.s32.totalorder %s27, 1
      %p296 = por %p294, %p295
      %p298 = scmp.ne.s32.totalorder %s281, %s297
      %p299 = scmp.eq.s32.totalorder %s27, 0
      %p300 = por %p298, %p299
      %s301 = ssub.s32 %s29, %s36
      %p302 = scmp.eq.s32.totalorder %s301, 0
      %s304 = sadd.s32 %s303, 1
      %s305 = scalar_select %p302, %s303, %s304
      %p308 = pneg %p302
      %p309 = scmp.eq.s32.totalorder %s21, 1
      %p310 = por %p308, %p309
      %p311 = scmp.ne.s32.totalorder %s303, %s306
      %p312 = scmp.eq.s32.totalorder %s21, 0
      %p313 = por %p311, %p312
      %p314 = scmp.ne.s32.totalorder %s303, %s306
      %p315 = scmp.eq.s32.totalorder %s26, 1
      %p316 = por %p314, %p315
      %p317 = scmp.ne.s32.totalorder %s306, %s307
      %p318 = scmp.eq.s32.totalorder %s26, 0
      %p319 = por %p317, %p318
      %p320 = scmp.ne.s32.totalorder %s306, %s307
      %p321 = scmp.eq.s32.totalorder %s27, 1
      %p322 = por %p320, %p321
      %p324 = scmp.ne.s32.totalorder %s307, %s323
      %p325 = scmp.eq.s32.totalorder %s27, 0
      %p326 = por %p324, %p325
      %s327 = ssub.s32 %s29, %s36
      %p328 = scmp.eq.s32.totalorder %s327, 0
      %s330 = sadd.s32 %s329, 1
      %s331 = scalar_select %p328, %s329, %s330
      %p334 = pneg %p328
      %p335 = scmp.eq.s32.totalorder %s21, 1
      %p336 = por %p334, %p335
      %p337 = scmp.ne.s32.totalorder %s329, %s332
      %p338 = scmp.eq.s32.totalorder %s21, 0
      %p339 = por %p337, %p338
      %p340 = scmp.ne.s32.totalorder %s329, %s332
      %p341 = scmp.eq.s32.totalorder %s26, 1
      %p342 = por %p340, %p341
      %p343 = scmp.ne.s32.totalorder %s332, %s333
      %p344 = scmp.eq.s32.totalorder %s26, 0
      %p345 = por %p343, %p344
      %p346 = scmp.ne.s32.totalorder %s332, %s333
      %p347 = scmp.eq.s32.totalorder %s27, 1
      %p348 = por %p346, %p347
      %p350 = scmp.ne.s32.totalorder %s333, %s349
      %p351 = scmp.eq.s32.totalorder %s27, 0
      %p352 = por %p350, %p351
      %s354 = sadd.s32 %s353, 1
      %p357 = scmp.eq.s32.totalorder %s21, 1
      %p358 = scmp.ne.s32.totalorder %s353, %s355
      %p359 = scmp.eq.s32.totalorder %s21, 0
      %p360 = por %p358, %p359
      %p361 = scmp.ne.s32.totalorder %s353, %s355
      %p362 = scmp.eq.s32.totalorder %s26, 1
      %p363 = por %p361, %p362
      %p364 = scmp.ne.s32.totalorder %s355, %s356
      %p365 = scmp.eq.s32.totalorder %s26, 0
      %p366 = por %p364, %p365
      %p367 = scmp.ne.s32.totalorder %s355, %s356
      %p368 = scmp.eq.s32.totalorder %s27, 1
      %p369 = por %p367, %p368
      %p371 = scmp.ne.s32.totalorder %s356, %s370
      %p372 = scmp.eq.s32.totalorder %s27, 0
      %p373 = por %p371, %p372
      %s375 = sadd.s32 %s374, 1
      %p378 = scmp.eq.s32.totalorder %s21, 1
      %p379 = scmp.ne.s32.totalorder %s374, %s376
      %p380 = scmp.eq.s32.totalorder %s21, 0
      %p381 = por %p379, %p380
      %p382 = scmp.ne.s32.totalorder %s374, %s376
      %p383 = scmp.eq.s32.totalorder %s26, 1
      %p384 = por %p382, %p383
      %p385 = scmp.ne.s32.totalorder %s376, %s377
      %p386 = scmp.eq.s32.totalorder %s26, 0
      %p387 = por %p385, %p386
      %p388 = scmp.ne.s32.totalorder %s376, %s377
      %p389 = scmp.eq.s32.totalorder %s27, 1
      %p390 = por %p388, %p389
      %p392 = scmp.ne.s32.totalorder %s377, %s391
      %p393 = scmp.eq.s32.totalorder %s27, 0
      %p394 = por %p392, %p393
      %s395 = ssub.s32 %s28, %s40
      %p396 = scmp.eq.s32.totalorder %s395, 0
      %s398 = sadd.s32 %s397, 1
      %s399 = scalar_select %p396, %s397, %s398
      %p402 = pneg %p396
      %p403 = scmp.eq.s32.totalorder %s21, 1
      %p404 = por %p402, %p403
      %p405 = scmp.ne.s32.totalorder %s397, %s400
      %p406 = scmp.eq.s32.totalorder %s21, 0
      %p407 = por %p405, %p406
      %p408 = scmp.ne.s32.totalorder %s397, %s400
      %p409 = scmp.eq.s32.totalorder %s26, 1
      %p410 = por %p408, %p409
      %p411 = scmp.ne.s32.totalorder %s400, %s401
      %p412 = scmp.eq.s32.totalorder %s26, 0
      %p413 = por %p411, %p412
      %p414 = scmp.ne.s32.totalorder %s400, %s401
      %p415 = scmp.eq.s32.totalorder %s27, 1
      %p416 = por %p414, %p415
      %p418 = scmp.ne.s32.totalorder %s401, %s417
      %p419 = scmp.eq.s32.totalorder %s27, 0
      %p420 = por %p418, %p419
      %p421 = scmp.le.s32.totalorder 1, %s21
      %p422 = scmp.lt.s32.totalorder %s21, 3
      %p423 = pnand %p421, %p422
      %p424 = pneg %p423
      // Predicated region
      $region9: #{transformer_encoder.1} parent=5 // pred_check
        _
      $region10: #{transformer_encoder.1} parent=5 // pred_check_branch
        %426 = sbr.rel (%p423) target = $region12
      $region11: #{transformer_encoder.1} parent=5 // pred_region
        %s427 = ssub.s32 %s21, 1
        // Predicated region
        $region13: #{transformer_encoder.1} parent=11 // pred_check
          %p428 = pneg %p59
        $region14: #{transformer_encoder.1} parent=11 // pred_check_branch
          %430 = sbr.rel (%p428) target = $region16
        $region15: #{transformer_encoder.1} parent=11 // pred_region
          %s431 = smul.u32 2, %s30
          %p432 = scmp.lt.s32.totalorder %s431, 1
          %s433 = scalar_select %p432, %s431, 1
          %s434 = smul.addr %s433, 8
          %s435 = scalar_lea.vmem %s0, %s434
          %s436 = smul.u32 2, %s30
        $region16: #{transformer_encoder.1} parent=11 // pred_fallthru
          _
        // Predicated region
        $region17: #{transformer_encoder.1} parent=11 // pred_check
          %p437 = pneg %p366
        $region18: #{transformer_encoder.1} parent=11 // pred_check_branch
          %439 = sbr.rel (%p437) target = $region20
        $region19: #{transformer_encoder.1} parent=11 // pred_region
          _
        $region20: #{transformer_encoder.1} parent=11 // pred_fallthru
          _
        // Predicated region
        $region21: #{transformer_encoder.1} parent=11 // pred_check
          %p440 = pneg %p387
        $region22: #{transformer_encoder.1} parent=11 // pred_check_branch
          %442 = sbr.rel (%p440) target = $region24
        $region23: #{transformer_encoder.1} parent=11 // pred_region
          _
        $region24: #{transformer_encoder.1} parent=11 // pred_fallthru
          _
      $region12: #{transformer_encoder.1} parent=5 // pred_fallthru
        _
      %p443 = scmp.lt.s32.totalorder %s21, 2
      // Predicated region
      $region25: #{transformer_encoder.1} parent=5 // pred_check
        %p444 = pneg %p443
      $region26: #{transformer_encoder.1} parent=5 // pred_check_branch
        %446 = sbr.rel (%p444) target = $region28
      $region27: #{transformer_encoder.1} parent=5 // pred_region
        // Predicated region
        $region29: #{transformer_encoder.1} parent=27 // pred_check
          %p447 = pneg %p79
        $region30: #{transformer_encoder.1} parent=27 // pred_check_branch
          %449 = sbr.rel (%p447) target = $region32
        $region31: #{transformer_encoder.1} parent=27 // pred_region
          %p450 = scmp.lt.s32.totalorder %s29, 1
          %s451 = scalar_select %p450, %s29, 1
          %s452 = smul.addr %s451, 8
          %s453 = smul.addr %s452, 8
          %s454 = scalar_lea.vmem %s1, %s453
        $region32: #{transformer_encoder.1} parent=27 // pred_fallthru
          _
        // Predicated region
        $region33: #{transformer_encoder.1} parent=27 // pred_check
          %p455 = pneg %p105
        $region34: #{transformer_encoder.1} parent=27 // pred_check_branch
          %457 = sbr.rel (%p455) target = $region36
        $region35: #{transformer_encoder.1} parent=27 // pred_region
          %p458 = scmp.lt.s32.totalorder %s29, 1
          %s459 = scalar_select %p458, %s29, 1
          %s460 = smul.addr %s459, 8
          %s461 = smul.addr %s460, 8
          %s462 = scalar_lea.vmem %s2, %s461
        $region36: #{transformer_encoder.1} parent=27 // pred_fallthru
          _
        // Predicated region
        $region37: #{transformer_encoder.1} parent=27 // pred_check
          %p463 = pneg %p131
        $region38: #{transformer_encoder.1} parent=27 // pred_check_branch
          %465 = sbr.rel (%p463) target = $region40
        $region39: #{transformer_encoder.1} parent=27 // pred_region
          %p466 = scmp.lt.s32.totalorder %s29, 1
          %s467 = scalar_select %p466, %s29, 1
          %s468 = scalar_lea.vmem %s3, %s467
        $region40: #{transformer_encoder.1} parent=27 // pred_fallthru
          _
        // Predicated region
        $region41: #{transformer_encoder.1} parent=27 // pred_check
          %p469 = pneg %p157
        $region42: #{transformer_encoder.1} parent=27 // pred_check_branch
          %471 = sbr.rel (%p469) target = $region44
        $region43: #{transformer_encoder.1} parent=27 // pred_region
          %p472 = scmp.lt.s32.totalorder %s29, 1
          %s473 = scalar_select %p472, %s29, 1
          %s474 = scalar_lea.vmem %s4, %s473
        $region44: #{transformer_encoder.1} parent=27 // pred_fallthru
          _
        // Predicated region
        $region45: #{transformer_encoder.1} parent=27 // pred_check
          %p475 = pneg %p183
        $region46: #{transformer_encoder.1} parent=27 // pred_check_branch
          %477 = sbr.rel (%p475) target = $region48
        $region47: #{transformer_encoder.1} parent=27 // pred_region
          %p478 = scmp.lt.s32.totalorder %s29, 1
          %s479 = scalar_select %p478, %s29, 1
          %s480 = scalar_lea.vmem %s5, %s479
        $region48: #{transformer_encoder.1} parent=27 // pred_fallthru
          _
        // Predicated region
        $region49: #{transformer_encoder.1} parent=27 // pred_check
          %p481 = pneg %p209
        $region50: #{transformer_encoder.1} parent=27 // pred_check_branch
          %483 = sbr.rel (%p481) target = $region52
        $region51: #{transformer_encoder.1} parent=27 // pred_region
          %p484 = scmp.lt.s32.totalorder %s29, 1
          %s485 = scalar_select %p484, %s29, 1
          %s486 = scalar_lea.vmem %s6, %s485
        $region52: #{transformer_encoder.1} parent=27 // pred_fallthru
          _
        // Predicated region
        $region53: #{transformer_encoder.1} parent=27 // pred_check
          %p487 = pneg %p235
        $region54: #{transformer_encoder.1} parent=27 // pred_check_branch
          %489 = sbr.rel (%p487) target = $region56
        $region55: #{transformer_encoder.1} parent=27 // pred_region
          %p490 = scmp.lt.s32.totalorder %s29, 1
          %s491 = scalar_select %p490, %s29, 1
          %s492 = scalar_lea.vmem %s7, %s491
        $region56: #{transformer_encoder.1} parent=27 // pred_fallthru
          _
        // Predicated region
        $region57: #{transformer_encoder.1} parent=27 // pred_check
          %p493 = pneg %p261
        $region58: #{transformer_encoder.1} parent=27 // pred_check_branch
          %495 = sbr.rel (%p493) target = $region60
        $region59: #{transformer_encoder.1} parent=27 // pred_region
          %p496 = scmp.lt.s32.totalorder %s29, 1
          %s497 = scalar_select %p496, %s29, 1
          %s498 = smul.addr %s497, 4
          %s499 = smul.addr %s498, 8
          %s500 = scalar_lea.vmem %s8, %s499
        $region60: #{transformer_encoder.1} parent=27 // pred_fallthru
          _
        // Predicated region
        $region61: #{transformer_encoder.1} parent=27 // pred_check
          %p501 = pneg %p287
        $region62: #{transformer_encoder.1} parent=27 // pred_check_branch
          %503 = sbr.rel (%p501) target = $region64
        $region63: #{transformer_encoder.1} parent=27 // pred_region
          %p504 = scmp.lt.s32.totalorder %s29, 1
          %s505 = scalar_select %p504, %s29, 1
          %s506 = scalar_lea.vmem %s9, %s505
        $region64: #{transformer_encoder.1} parent=27 // pred_fallthru
          _
        // Predicated region
        $region65: #{transformer_encoder.1} parent=27 // pred_check
          %p507 = pneg %p313
        $region66: #{transformer_encoder.1} parent=27 // pred_check_branch
          %509 = sbr.rel (%p507) target = $region68
        $region67: #{transformer_encoder.1} parent=27 // pred_region
          %p510 = scmp.lt.s32.totalorder %s29, 1
          %s511 = scalar_select %p510, %s29, 1
          %s512 = smul.addr %s511, 16
          %s513 = smul.addr %s512, 8
          %s514 = scalar_lea.vmem %s10, %s513
        $region68: #{transformer_encoder.1} parent=27 // pred_fallthru
          _
        // Predicated region
        $region69: #{transformer_encoder.1} parent=27 // pred_check
          %p515 = pneg %p339
        $region70: #{transformer_encoder.1} parent=27 // pred_check_branch
          %517 = sbr.rel (%p515) target = $region72
        $region71: #{transformer_encoder.1} parent=27 // pred_region
          %p518 = scmp.lt.s32.totalorder %s29, 1
          %s519 = scalar_select %p518, %s29, 1
          %s520 = scalar_lea.vmem %s11, %s519
        $region72: #{transformer_encoder.1} parent=27 // pred_fallthru
          _
      $region28: #{transformer_encoder.1} parent=5 // pred_fallthru
        _
      %p521 = scmp.le.s32.totalorder 1, %s21
      %p522 = scmp.lt.s32.totalorder %s21, 3
      %p523 = pnand %p521, %p522
      %p524 = pneg %p523
      // Predicated region
      $region73: #{transformer_encoder.1} parent=5 // pred_check
        _
      $region74: #{transformer_encoder.1} parent=5 // pred_check_branch
        %526 = sbr.rel (%p523) target = $region76
      $region75: #{transformer_encoder.1} parent=5 // pred_region
        %s527 = ssub.s32 %s21, 1
        %s528 = smul.u32 2, %s30
        %p529 = scmp.lt.s32.totalorder %s528, 1
        %s530 = scalar_select %p529, %s528, 1
        %s531 = smul.addr %s530, 8
        %s532 = scalar_lea.vmem %s0, %s531
        %p533 = pneg %p59
        %p534 = pneg %p56
        %p535 = scmp.lt.s32.totalorder %s31, 1
        %s536 = scalar_select %p535, %s31, 1
        %s537 = smul.addr %s536, 8
        %s538 = smul.addr %s537, 8
        %s539 = scalar_lea.vmem %s1, %s538
        %p540 = pneg %p85
        %p541 = pneg %p82
        %p542 = scmp.lt.s32.totalorder %s31, 1
        %s543 = scalar_select %p542, %s31, 1
        %s544 = smul.addr %s543, 8
        %s545 = smul.addr %s544, 8
        %s546 = scalar_lea.vmem %s2, %s545
        %p547 = pneg %p111
        %p548 = pneg %p108
        %p549 = scmp.lt.s32.totalorder %s31, 1
        %s550 = scalar_select %p549, %s31, 1
        %s551 = scalar_lea.vmem %s3, %s550
        %p552 = pneg %p137
        %p553 = pneg %p134
        %p554 = scmp.lt.s32.totalorder %s31, 1
        %s555 = scalar_select %p554, %s31, 1
        %s556 = scalar_lea.vmem %s4, %s555
        %p557 = pneg %p163
        %p558 = pneg %p160
        %p559 = scmp.lt.s32.totalorder %s31, 1
        %s560 = scalar_select %p559, %s31, 1
        %s561 = scalar_lea.vmem %s5, %s560
        %p562 = pneg %p189
        %p563 = pneg %p186
        %p564 = scmp.lt.s32.totalorder %s31, 1
        %s565 = scalar_select %p564, %s31, 1
        %s566 = scalar_lea.vmem %s6, %s565
        %p567 = pneg %p215
        %p568 = pneg %p212
        %p569 = scmp.lt.s32.totalorder %s31, 1
        %s570 = scalar_select %p569, %s31, 1
        %s571 = scalar_lea.vmem %s7, %s570
        %p572 = pneg %p241
        %p573 = pneg %p238
        %p574 = scmp.lt.s32.totalorder %s31, 1
        %s575 = scalar_select %p574, %s31, 1
        %s576 = smul.addr %s575, 4
        %s577 = smul.addr %s576, 8
        %s578 = scalar_lea.vmem %s8, %s577
        %p579 = pneg %p267
        %p580 = pneg %p264
        %p581 = scmp.lt.s32.totalorder %s31, 1
        %s582 = scalar_select %p581, %s31, 1
        %s583 = scalar_lea.vmem %s9, %s582
        %p584 = pneg %p293
        %p585 = pneg %p290
        %p586 = scmp.lt.s32.totalorder %s31, 1
        %s587 = scalar_select %p586, %s31, 1
        %s588 = smul.addr %s587, 16
        %s589 = smul.addr %s588, 8
        %s590 = scalar_lea.vmem %s10, %s589
        %p591 = pneg %p319
        %p592 = pneg %p316
        %p593 = scmp.lt.s32.totalorder %s31, 1
        %s594 = scalar_select %p593, %s31, 1
        %s595 = scalar_lea.vmem %s11, %s594
        %p596 = pneg %p345
        %p597 = pneg %p342
        %p598 = pneg %p366
        %p599 = pneg %p363
        %p600 = pneg %p387
        %p601 = pneg %p384
        %p602 = pneg %p413
        %p603 = pneg %p410
        %s604 = smul.u32 2, %s30
        %p605 = scmp.lt.s32.totalorder %s604, 1
        %s606 = scalar_select %p605, %s604, 1
        %s607 = smul.addr %s606, 8
        %s608 = scalar_lea.vmem %s0, %s607
        %s609 = smul.u32 2, %s30
        %p610 = scmp.lt.s32.totalorder %s31, 1
        %s611 = scalar_select %p610, %s31, 1
        %s612 = smul.addr %s611, 8
        %s613 = smul.addr %s612, 8
        %s614 = scalar_lea.vmem %s1, %s613
        %p615 = scmp.lt.s32.totalorder %s31, 1
        %s616 = scalar_select %p615, %s31, 1
        %s617 = smul.addr %s616, 8
        %s618 = smul.addr %s617, 8
        %s619 = scalar_lea.vmem %s2, %s618
        %p620 = scmp.lt.s32.totalorder %s31, 1
        %s621 = scalar_select %p620, %s31, 1
        %s622 = scalar_lea.vmem %s3, %s621
        %p623 = scmp.lt.s32.totalorder %s31, 1
        %s624 = scalar_select %p623, %s31, 1
        %s625 = scalar_lea.vmem %s4, %s624
        %p626 = scmp.lt.s32.totalorder %s31, 1
        %s627 = scalar_select %p626, %s31, 1
        %s628 = scalar_lea.vmem %s5, %s627
        %p629 = scmp.lt.s32.totalorder %s31, 1
        %s630 = scalar_select %p629, %s31, 1
        %s631 = scalar_lea.vmem %s6, %s630
        %p632 = scmp.lt.s32.totalorder %s31, 1
        %s633 = scalar_select %p632, %s31, 1
        %s634 = scalar_lea.vmem %s7, %s633
        %p635 = scmp.lt.s32.totalorder %s31, 1
        %s636 = scalar_select %p635, %s31, 1
        %s637 = smul.addr %s636, 4
        %s638 = smul.addr %s637, 8
        %s639 = scalar_lea.vmem %s8, %s638
        %p640 = scmp.lt.s32.totalorder %s31, 1
        %s641 = scalar_select %p640, %s31, 1
        %s642 = scalar_lea.vmem %s9, %s641
        %p643 = scmp.lt.s32.totalorder %s31, 1
        %s644 = scalar_select %p643, %s31, 1
        %s645 = smul.addr %s644, 16
        %s646 = smul.addr %s645, 8
        %s647 = scalar_lea.vmem %s10, %s646
        %p648 = scmp.lt.s32.totalorder %s31, 1
        %s649 = scalar_select %p648, %s31, 1
        %s650 = scalar_lea.vmem %s11, %s649
        %s651 = smul.u32 2, %s30
        %p652 = scmp.eq.s32.totalorder %s31, 0
        // Predicated region
        $region77: #{transformer_encoder.1} parent=75 // pred_check
          %p653 = pneg %p652
        $region78: #{transformer_encoder.1} parent=75 // pred_check_branch
          %655 = sbr.rel (%p653) target = $region80
        $region79: #{transformer_encoder.1} parent=75 // pred_region
          %v656 = vld [vmem:[%s608] sm:$0xff]
          %v657 = vld [vmem:[%s608 + $0x8] sm:$0xff]
          %vm658 = vcmask 261120
          %659 = vst.msk [vmem:[#allocation2] sm:$0xff] %vm658, %v656
          %660 = vst.msk [vmem:[#allocation2 + $0x8] sm:$0xff] %vm658, %v657
        $region80: #{transformer_encoder.1} parent=75 // pred_fallthru
          _
        %v661 = vld [vmem:[#allocation2] sm:$0xff]
        %v662 = vld [vmem:[#allocation2 + $0x8] sm:$0xff]
        %v663 = vld [vmem:[%s625] sm:$0x1]
        %v664 = vld [vmem:[%s628] sm:$0x1]
        %vm665 = vcmask 261120
        %v666 = vsel %vm665, %v661, 0.0
        %667 = vadd.xlane.f32.xlu0 %v666
        %v668 = vpop.xlane.xlu0 %667
        %v669 = vsel %vm665, %v662, 0.0
        %670 = vadd.xlane.f32.xlu0 %v669
        %v671 = vpop.xlane.xlu0 %670
        %v672 = vrcp.pop 32.0
        %v673 = vmul.f32 %v668, %v672
        %v674 = vmul.f32 %v671, %v672
        %v675 = vsub.f32 %v661, %v673
        %v676 = vsub.f32 %v662, %v674
        %v677 = vmul.f32 %v675, %v675
        %v678 = vmul.f32 %v676, %v676
        %v679 = vsel %vm665, %v677, 0.0
        %680 = vadd.xlane.f32.xlu0 %v679
        %v681 = vpop.xlane.xlu0 %680
        %v682 = vsel %vm665, %v678, 0.0
        %683 = vadd.xlane.f32.xlu0 %v682
        %v684 = vpop.xlane.xlu0 %683
        %v685 = vmul.f32 %v681, %v672
        %v686 = vmul.f32 %v684, %v672
        %v687 = vadd.f32 %v685, 1e-05
        %v688 = vadd.f32 %v686, 1e-05
        %v689 = vrsqrt.pop %v687
        %v690 = vrsqrt.pop %v688
        %v691 = vmul.f32 %v675, %v689
        %v692 = vmul.f32 %v676, %v690
        %v694 = vlaneseq
        %v695 = vshrl.u32 %v694, 7
        %v696 = vsub.s32 0, %v695
        %v697 = vrot.slane %v663, %v696
        %v699 = vmul.f32 %v691, %v697
        %v700 = vmul.f32 %v692, %v697
        %v702 = vlaneseq
        %v703 = vshrl.u32 %v702, 7
        %v704 = vsub.s32 0, %v703
        %v705 = vrot.slane %v664, %v704
        %v707 = vadd.f32 %v699, %v705
        %v708 = vadd.f32 %v700, %v705
        %v709 = vld [vmem:[%s614] sm:$0xff]
        %v710 = vld [vmem:[%s614 + $0x8] sm:$0xff]
        %v711 = vld [vmem:[%s614 + $0x10] sm:$0xff]
        %v712 = vld [vmem:[%s614 + $0x18] sm:$0xff]
        %v713 = vld [vmem:[%s614 + $0x20] sm:$0xff]
        %v714 = vld [vmem:[%s614 + $0x28] sm:$0xff]
        %v715 = vld [vmem:[%s614 + $0x30] sm:$0xff]
        %v716 = vld [vmem:[%s614 + $0x38] sm:$0xff]
        %v718 = vsel %vm665, %v707, 0
        %v721 = vsel %vm665, %v708, 0
        %723 = vmatprep.subr.mxu0 %v710
        %724 = vmatpush1.msra.mxu0 %v709
        %725 = vmatprep.subr.mxu0 %v712
        %726 = vmatpush1.msra.mxu0 %v711
        %727 = vmatprep.subr.mxu0 %v714
        %728 = vmatpush1.msra.mxu0 %v713
        %729 = vmatprep.subr.mxu0 %v716
        %730 = vmatpush1.msra.mxu0 %v715
        %731 = vmatprep.subr.mxu0 0.0
        %732 = vmatpush1.msra.mxu0 0.0
        %733 = vmatprep.subr.mxu0 0.0
        %734 = vmatpush1.msra.mxu0 0.0
        %735 = vmatprep.subr.mxu0 0.0
        %736 = vmatpush1.msra.mxu0 0.0
        %737 = vmatprep.subr.mxu0 0.0
        %738 = vmatpush1.msra.mxu0 0.0
        %739 = vmatprep.subr.mxu0 0.0
        %740 = vmatpush1.msra.mxu0 0.0
        %741 = vmatprep.subr.mxu0 0.0
        %742 = vmatpush1.msra.mxu0 0.0
        %743 = vmatprep.subr.mxu0 0.0
        %744 = vmatpush1.msra.mxu0 0.0
        %745 = vmatprep.subr.mxu0 0.0
        %746 = vmatpush1.msra.mxu0 0.0
        %747 = vmatprep.subr.mxu0 0.0
        %748 = vmatpush1.msra.mxu0 0.0
        %749 = vmatprep.subr.mxu0 0.0
        %750 = vmatpush1.msra.mxu0 0.0
        %751 = vmatprep.subr.mxu0 0.0
        %752 = vmatpush1.msra.mxu0 0.0
        %753 = vmatprep.subr.mxu0 0.0
        %754 = vmatpush1.msra.mxu0 0.0
        %755 = vmatprep.subr.mxu0 0.0
        %756 = vmatpush1.msra.mxu0 0.0
        %757 = vmatprep.subr.mxu0 0.0
        %758 = vmatpush1.msra.mxu0 0.0
        %759 = vmatprep.subr.mxu0 0.0
        %760 = vmatpush1.msra.mxu0 0.0
        %761 = vmatprep.subr.mxu0 0.0
        %762 = vmatpush1.msra.mxu0 0.0
        %763 = vmatprep.subr.mxu0 0.0
        %764 = vmatpush1.msra.mxu0 0.0
        %765 = vmatprep.subr.mxu0 0.0
        %766 = vmatpush1.msra.mxu0 0.0
        %767 = vmatprep.subr.mxu0 0.0
        %768 = vmatpush1.msra.mxu0 0.0
        %769 = vmatprep.subr.mxu0 0.0
        %770 = vmatpush1.msra.mxu0 0.0
        %771 = vmatprep.subr.mxu0 0.0
        %772 = vmatpush1.msra.mxu0 0.0
        %773 = vmatprep.subr.mxu0 0.0
        %774 = vmatpush1.msra.mxu0 0.0
        %775 = vmatprep.subr.mxu0 0.0
        %776 = vmatpush1.msra.mxu0 0.0
        %777 = vmatprep.subr.mxu0 0.0
        %778 = vmatpush1.msra.mxu0 0.0
        %779 = vmatprep.subr.mxu0 0.0
        %780 = vmatpush1.msra.mxu0 0.0
        %781 = vmatprep.subr.mxu0 0.0
        %782 = vmatpush1.msra.mxu0 0.0
        %783 = vmatprep.subr.mxu0 0.0
        %784 = vmatpush1.msra.mxu0 0.0
        %785 = vmatprep.subr.mxu0 0.0
        %786 = vmatpush1.msra.mxu0 0.0
        %787 = vmatprep.mubr.f32.mxu0 0.0
        %788 = vmatmul.mubr.f32.gmra.mrb[0].mxu0 %v718
        %v789 = vpop.f32.mrb[0].mxu0
        %v790 = vadd.f32 0.0, %v789
        %v791 = vpop.f32.mrb[0].mxu0
        %v792 = vadd.f32 0.0, %v791
        %793 = vmatprep.mubr.f32.mxu0 0.0
        %794 = vmatmul.mubr.f32.gmra.mrb[0].mxu0 %v721
        %v795 = vpop.f32.mrb[0].mxu0
        %v796 = vadd.f32 0.0, %v795
        %v797 = vpop.f32.mrb[0].mxu0
        %v798 = vadd.f32 0.0, %v797
        %799 = vdwg.mxu0
        %801 = vrot.lane.b32.xlu0 %v790, 64
        %v802 = vpop.permute.xlu0 %801
        %v803 = vsel %vm665, %v790, 0
        %v805 = vsel %vm665, %v802, 0
        %807 = vmatprep.subr.mxu0 0.0
        %808 = vmatpush1.xpose.msra.mxu0 %v805
        %809 = vmatprep.subr.mxu0 0.0
        %810 = vmatpush1.xpose.msra.mxu0 0.0
        %811 = vmatprep.subr.mxu0 0.0
        %812 = vmatpush1.xpose.msra.mxu0 0.0
        %813 = vmatprep.subr.mxu0 0.0
        %814 = vmatpush1.xpose.msra.mxu0 0.0
        %815 = vmatprep.subr.mxu0 0.0
        %816 = vmatpush1.xpose.msra.mxu0 0.0
        %817 = vmatprep.subr.mxu0 0.0
        %818 = vmatpush1.xpose.msra.mxu0 0.0
        %819 = vmatprep.subr.mxu0 0.0
        %820 = vmatpush1.xpose.msra.mxu0 0.0
        %821 = vmatprep.subr.mxu0 0.0
        %822 = vmatpush1.xpose.msra.mxu0 0.0
        %823 = vmatprep.subr.mxu0 0.0
        %824 = vmatpush1.xpose.msra.mxu0 0.0
        %825 = vmatprep.subr.mxu0 0.0
        %826 = vmatpush1.xpose.msra.mxu0 0.0
        %827 = vmatprep.subr.mxu0 0.0
        %828 = vmatpush1.xpose.msra.mxu0 0.0
        %829 = vmatprep.subr.mxu0 0.0
        %830 = vmatpush1.xpose.msra.mxu0 0.0
        %831 = vmatprep.subr.mxu0 0.0
        %832 = vmatpush1.xpose.msra.mxu0 0.0
        %833 = vmatprep.subr.mxu0 0.0
        %834 = vmatpush1.xpose.msra.mxu0 0.0
        %835 = vmatprep.subr.mxu0 0.0
        %836 = vmatpush1.xpose.msra.mxu0 0.0
        %837 = vmatprep.subr.mxu0 0.0
        %838 = vmatpush1.xpose.msra.mxu0 0.0
        %839 = vmatprep.subr.mxu0 0.0
        %840 = vmatpush1.xpose.msra.mxu0 0.0
        %841 = vmatprep.subr.mxu0 0.0
        %842 = vmatpush1.xpose.msra.mxu0 0.0
        %843 = vmatprep.subr.mxu0 0.0
        %844 = vmatpush1.xpose.msra.mxu0 0.0
        %845 = vmatprep.subr.mxu0 0.0
        %846 = vmatpush1.xpose.msra.mxu0 0.0
        %847 = vmatprep.subr.mxu0 0.0
        %848 = vmatpush1.xpose.msra.mxu0 0.0
        %849 = vmatprep.subr.mxu0 0.0
        %850 = vmatpush1.xpose.msra.mxu0 0.0
        %851 = vmatprep.subr.mxu0 0.0
        %852 = vmatpush1.xpose.msra.mxu0 0.0
        %853 = vmatprep.subr.mxu0 0.0
        %854 = vmatpush1.xpose.msra.mxu0 0.0
        %855 = vmatprep.subr.mxu0 0.0
        %856 = vmatpush1.xpose.msra.mxu0 0.0
        %857 = vmatprep.subr.mxu0 0.0
        %858 = vmatpush1.xpose.msra.mxu0 0.0
        %859 = vmatprep.subr.mxu0 0.0
        %860 = vmatpush1.xpose.msra.mxu0 0.0
        %861 = vmatprep.subr.mxu0 0.0
        %862 = vmatpush1.xpose.msra.mxu0 0.0
        %863 = vmatprep.subr.mxu0 0.0
        %864 = vmatpush1.xpose.msra.mxu0 0.0
        %865 = vmatprep.subr.mxu0 0.0
        %866 = vmatpush1.xpose.msra.mxu0 0.0
        %867 = vmatprep.subr.mxu0 0.0
        %868 = vmatpush1.xpose.msra.mxu0 0.0
        %869 = vmatprep.subr.mxu0 0.0
        %870 = vmatpush1.xpose.msra.mxu0 0.0
        %871 = vmatprep.mubr.f32.mxu0 0.0
        %872 = vmatmul.mubr.f32.gmra.mrb[0].mxu0 %v803
        %v873 = vpop.f32.mrb[0].mxu0
        %v874 = vadd.f32 0.0, %v873
        %v875 = vpop.f32.mrb[0].mxu0
        %876 = vdwg.mxu0
        %878 = vrot.lane.b32.xlu0 %v796, 64
        %v879 = vpop.permute.xlu0 %878
        %v880 = vsel %vm665, %v796, 0
        %v882 = vsel %vm665, %v879, 0
        %884 = vmatprep.subr.mxu0 0.0
        %885 = vmatpush1.xpose.msra.mxu0 %v882
        %886 = vmatprep.subr.mxu0 0.0
        %887 = vmatpush1.xpose.msra.mxu0 0.0
        %888 = vmatprep.subr.mxu0 0.0
        %889 = vmatpush1.xpose.msra.mxu0 0.0
        %890 = vmatprep.subr.mxu0 0.0
        %891 = vmatpush1.xpose.msra.mxu0 0.0
        %892 = vmatprep.subr.mxu0 0.0
        %893 = vmatpush1.xpose.msra.mxu0 0.0
        %894 = vmatprep.subr.mxu0 0.0
        %895 = vmatpush1.xpose.msra.mxu0 0.0
        %896 = vmatprep.subr.mxu0 0.0
        %897 = vmatpush1.xpose.msra.mxu0 0.0
        %898 = vmatprep.subr.mxu0 0.0
        %899 = vmatpush1.xpose.msra.mxu0 0.0
        %900 = vmatprep.subr.mxu0 0.0
        %901 = vmatpush1.xpose.msra.mxu0 0.0
        %902 = vmatprep.subr.mxu0 0.0
        %903 = vmatpush1.xpose.msra.mxu0 0.0
        %904 = vmatprep.subr.mxu0 0.0
        %905 = vmatpush1.xpose.msra.mxu0 0.0
        %906 = vmatprep.subr.mxu0 0.0
        %907 = vmatpush1.xpose.msra.mxu0 0.0
        %908 = vmatprep.subr.mxu0 0.0
        %909 = vmatpush1.xpose.msra.mxu0 0.0
        %910 = vmatprep.subr.mxu0 0.0
        %911 = vmatpush1.xpose.msra.mxu0 0.0
        %912 = vmatprep.subr.mxu0 0.0
        %913 = vmatpush1.xpose.msra.mxu0 0.0
        %914 = vmatprep.subr.mxu0 0.0
        %915 = vmatpush1.xpose.msra.mxu0 0.0
        %916 = vmatprep.subr.mxu0 0.0
        %917 = vmatpush1.xpose.msra.mxu0 0.0
        %918 = vmatprep.subr.mxu0 0.0
        %919 = vmatpush1.xpose.msra.mxu0 0.0
        %920 = vmatprep.subr.mxu0 0.0
        %921 = vmatpush1.xpose.msra.mxu0 0.0
        %922 = vmatprep.subr.mxu0 0.0
        %923 = vmatpush1.xpose.msra.mxu0 0.0
        %924 = vmatprep.subr.mxu0 0.0
        %925 = vmatpush1.xpose.msra.mxu0 0.0
        %926 = vmatprep.subr.mxu0 0.0
        %927 = vmatpush1.xpose.msra.mxu0 0.0
        %928 = vmatprep.subr.mxu0 0.0
        %929 = vmatpush1.xpose.msra.mxu0 0.0
        %930 = vmatprep.subr.mxu0 0.0
        %931 = vmatpush1.xpose.msra.mxu0 0.0
        %932 = vmatprep.subr.mxu0 0.0
        %933 = vmatpush1.xpose.msra.mxu0 0.0
        %934 = vmatprep.subr.mxu0 0.0
        %935 = vmatpush1.xpose.msra.mxu0 0.0
        %936 = vmatprep.subr.mxu0 0.0
        %937 = vmatpush1.xpose.msra.mxu0 0.0
        %938 = vmatprep.subr.mxu0 0.0
        %939 = vmatpush1.xpose.msra.mxu0 0.0
        %940 = vmatprep.subr.mxu0 0.0
        %941 = vmatpush1.xpose.msra.mxu0 0.0
        %942 = vmatprep.subr.mxu0 0.0
        %943 = vmatpush1.xpose.msra.mxu0 0.0
        %944 = vmatprep.subr.mxu0 0.0
        %945 = vmatpush1.xpose.msra.mxu0 0.0
        %946 = vmatprep.subr.mxu0 0.0
        %947 = vmatpush1.xpose.msra.mxu0 0.0
        %948 = vmatprep.mubr.f32.mxu0 0.0
        %949 = vmatmul.mubr.f32.gmra.mrb[0].mxu0 %v880
        %v950 = vpop.f32.mrb[0].mxu0
        %v951 = vadd.f32 0.0, %v950
        %v952 = vpop.f32.mrb[0].mxu0
        %953 = vdwg.mxu0
        %v954 = vmul.f32 %v874, 0.17677669
        %v955 = vmul.f32 %v951, 0.17677669
        %vm956 = vcmask 64512
        %v957 = vsel %vm956, %v954, -inf
        %958 = vmax.xlane.f32.xlu0 %v957
        %v959 = vpop.xlane.xlu0 %958
        %v960 = vsel %vm956, %v955, -inf
        %961 = vmax.xlane.f32.xlu0 %v960
        %v962 = vpop.xlane.xlu0 %961
        %v963 = vsub.f32 %v954, %v959
        %v964 = vsub.f32 %v955, %v962
        %v965 = vmul.f32 %v963, 1.442695
        %v966 = vpow.pop %v965
        %v967 = vmul.f32 %v964, 1.442695
        %v968 = vpow.pop %v967
        %v969 = vsel %vm956, %v966, 0.0
        %970 = vadd.xlane.f32.xlu0 %v969
        %v971 = vpop.xlane.xlu0 %970
        %v972 = vsel %vm956, %v968, 0.0
        %973 = vadd.xlane.f32.xlu0 %v972
        %v974 = vpop.xlane.xlu0 %973
        %v975 = vrcp.pop %v971
        %v976 = vmul.f32 %v966, %v975
        %v977 = vrcp.pop %v974
        %v978 = vmul.f32 %v968, %v977
        %v980 = vsel %vm956, %v976, 0
        %982 = vmatprep.subr.mxu0 0.0
        %983 = vmatpush1.msra.mxu0 %v792
        %984 = vmatprep.subr.mxu0 0.0
        %985 = vmatpush1.msra.mxu0 0.0
        %986 = vmatprep.subr.mxu0 0.0
        %987 = vmatpush1.msra.mxu0 0.0
        %988 = vmatprep.subr.mxu0 0.0
        %989 = vmatpush1.msra.mxu0 0.0
        %990 = vmatprep.subr.mxu0 0.0
        %991 = vmatpush1.msra.mxu0 0.0
        %992 = vmatprep.subr.mxu0 0.0
        %993 = vmatpush1.msra.mxu0 0.0
        %994 = vmatprep.subr.mxu0 0.0
        %995 = vmatpush1.msra.mxu0 0.0
        %996 = vmatprep.subr.mxu0 0.0
        %997 = vmatpush1.msra.mxu0 0.0
        %998 = vmatprep.subr.mxu0 0.0
        %999 = vmatpush1.msra.mxu0 0.0
        %1000 = vmatprep.subr.mxu0 0.0
        %1001 = vmatpush1.msra.mxu0 0.0
        %1002 = vmatprep.subr.mxu0 0.0
        %1003 = vmatpush1.msra.mxu0 0.0
        %1004 = vmatprep.subr.mxu0 0.0
        %1005 = vmatpush1.msra.mxu0 0.0
        %1006 = vmatprep.subr.mxu0 0.0
        %1007 = vmatpush1.msra.mxu0 0.0
        %1008 = vmatprep.subr.mxu0 0.0
        %1009 = vmatpush1.msra.mxu0 0.0
        %1010 = vmatprep.subr.mxu0 0.0
        %1011 = vmatpush1.msra.mxu0 0.0
        %1012 = vmatprep.subr.mxu0 0.0
        %1013 = vmatpush1.msra.mxu0 0.0
        %1014 = vmatprep.subr.mxu0 0.0
        %1015 = vmatpush1.msra.mxu0 0.0
        %1016 = vmatprep.subr.mxu0 0.0
        %1017 = vmatpush1.msra.mxu0 0.0
        %1018 = vmatprep.subr.mxu0 0.0
        %1019 = vmatpush1.msra.mxu0 0.0
        %1020 = vmatprep.subr.mxu0 0.0
        %1021 = vmatpush1.msra.mxu0 0.0
        %1022 = vmatprep.subr.mxu0 0.0
        %1023 = vmatpush1.msra.mxu0 0.0
        %1024 = vmatprep.subr.mxu0 0.0
        %1025 = vmatpush1.msra.mxu0 0.0
        %1026 = vmatprep.subr.mxu0 0.0
        %1027 = vmatpush1.msra.mxu0 0.0
        %1028 = vmatprep.subr.mxu0 0.0
        %1029 = vmatpush1.msra.mxu0 0.0
        %1030 = vmatprep.subr.mxu0 0.0
        %1031 = vmatpush1.msra.mxu0 0.0
        %1032 = vmatprep.subr.mxu0 0.0
        %1033 = vmatpush1.msra.mxu0 0.0
        %1034 = vmatprep.subr.mxu0 0.0
        %1035 = vmatpush1.msra.mxu0 0.0
        %1036 = vmatprep.subr.mxu0 0.0
        %1037 = vmatpush1.msra.mxu0 0.0
        %1038 = vmatprep.subr.mxu0 0.0
        %1039 = vmatpush1.msra.mxu0 0.0
        %1040 = vmatprep.subr.mxu0 0.0
        %1041 = vmatpush1.msra.mxu0 0.0
        %1042 = vmatprep.subr.mxu0 0.0
        %1043 = vmatpush1.msra.mxu0 0.0
        %1044 = vmatprep.subr.mxu0 0.0
        %1045 = vmatpush1.msra.mxu0 0.0
        %1046 = vmatprep.mubr.f32.mxu0 0.0
        %1047 = vmatmul.mubr.f32.gmra.mrb[0].mxu0 %v980
        %v1048 = vpop.f32.mrb[0].mxu0
        %v1049 = vadd.f32 0.0, %v1048
        %v1050 = vpop.f32.mrb[0].mxu0
        %1051 = vdwg.mxu0
        %v1053 = vsel %vm956, %v978, 0
        %1055 = vmatprep.subr.mxu0 0.0
        %1056 = vmatpush1.msra.mxu0 %v798
        %1057 = vmatprep.subr.mxu0 0.0
        %1058 = vmatpush1.msra.mxu0 0.0
        %1059 = vmatprep.subr.mxu0 0.0
        %1060 = vmatpush1.msra.mxu0 0.0
        %1061 = vmatprep.subr.mxu0 0.0
        %1062 = vmatpush1.msra.mxu0 0.0
        %1063 = vmatprep.subr.mxu0 0.0
        %1064 = vmatpush1.msra.mxu0 0.0
        %1065 = vmatprep.subr.mxu0 0.0
        %1066 = vmatpush1.msra.mxu0 0.0
        %1067 = vmatprep.subr.mxu0 0.0
        %1068 = vmatpush1.msra.mxu0 0.0
        %1069 = vmatprep.subr.mxu0 0.0
        %1070 = vmatpush1.msra.mxu0 0.0
        %1071 = vmatprep.subr.mxu0 0.0
        %1072 = vmatpush1.msra.mxu0 0.0
        %1073 = vmatprep.subr.mxu0 0.0
        %1074 = vmatpush1.msra.mxu0 0.0
        %1075 = vmatprep.subr.mxu0 0.0
        %1076 = vmatpush1.msra.mxu0 0.0
        %1077 = vmatprep.subr.mxu0 0.0
        %1078 = vmatpush1.msra.mxu0 0.0
        %1079 = vmatprep.subr.mxu0 0.0
        %1080 = vmatpush1.msra.mxu0 0.0
        %1081 = vmatprep.subr.mxu0 0.0
        %1082 = vmatpush1.msra.mxu0 0.0
        %1083 = vmatprep.subr.mxu0 0.0
        %1084 = vmatpush1.msra.mxu0 0.0
        %1085 = vmatprep.subr.mxu0 0.0
        %1086 = vmatpush1.msra.mxu0 0.0
        %1087 = vmatprep.subr.mxu0 0.0
        %1088 = vmatpush1.msra.mxu0 0.0
        %1089 = vmatprep.subr.mxu0 0.0
        %1090 = vmatpush1.msra.mxu0 0.0
        %1091 = vmatprep.subr.mxu0 0.0
        %1092 = vmatpush1.msra.mxu0 0.0
        %1093 = vmatprep.subr.mxu0 0.0
        %1094 = vmatpush1.msra.mxu0 0.0
        %1095 = vmatprep.subr.mxu0 0.0
        %1096 = vmatpush1.msra.mxu0 0.0
        %1097 = vmatprep.subr.mxu0 0.0
        %1098 = vmatpush1.msra.mxu0 0.0
        %1099 = vmatprep.subr.mxu0 0.0
        %1100 = vmatpush1.msra.mxu0 0.0
        %1101 = vmatprep.subr.mxu0 0.0
        %1102 = vmatpush1.msra.mxu0 0.0
        %1103 = vmatprep.subr.mxu0 0.0
        %1104 = vmatpush1.msra.mxu0 0.0
        %1105 = vmatprep.subr.mxu0 0.0
        %1106 = vmatpush1.msra.mxu0 0.0
        %1107 = vmatprep.subr.mxu0 0.0
        %1108 = vmatpush1.msra.mxu0 0.0
        %1109 = vmatprep.subr.mxu0 0.0
        %1110 = vmatpush1.msra.mxu0 0.0
        %1111 = vmatprep.subr.mxu0 0.0
        %1112 = vmatpush1.msra.mxu0 0.0
        %1113 = vmatprep.subr.mxu0 0.0
        %1114 = vmatpush1.msra.mxu0 0.0
        %1115 = vmatprep.subr.mxu0 0.0
        %1116 = vmatpush1.msra.mxu0 0.0
        %1117 = vmatprep.subr.mxu0 0.0
        %1118 = vmatpush1.msra.mxu0 0.0
        %1119 = vmatprep.mubr.f32.mxu0 0.0
        %1120 = vmatmul.mubr.f32.gmra.mrb[0].mxu0 %v1053
        %v1121 = vpop.f32.mrb[0].mxu0
        %v1122 = vadd.f32 0.0, %v1121
        %v1123 = vpop.f32.mrb[0].mxu0
        %1124 = vdwg.mxu0
        %1125 = vst.msk [vmem:[#allocation3] sm:$0xff] %vm665, %v1049
        %1126 = vst.msk [vmem:[#allocation3 + $0x8] sm:$0xff] %vm665, %v1122
        %1127 = vrot.lane.b32.xlu0 %v790, 96
        %v1128 = vpop.permute.xlu0 %1127
        %1129 = vrot.lane.b32.xlu0 %v790, 32
        %v1130 = vpop.permute.xlu0 %1129
        %v1131 = vsel %vm665, %v1128, 0
        %v1133 = vsel %vm665, %v1130, 0
        %1135 = vmatprep.subr.mxu0 0.0
        %1136 = vmatpush1.xpose.msra.mxu0 %v1133
        %1137 = vmatprep.subr.mxu0 0.0
        %1138 = vmatpush1.xpose.msra.mxu0 0.0
        %1139 = vmatprep.subr.mxu0 0.0
        %1140 = vmatpush1.xpose.msra.mxu0 0.0
        %1141 = vmatprep.subr.mxu0 0.0
        %1142 = vmatpush1.xpose.msra.mxu0 0.0
        %1143 = vmatprep.subr.mxu0 0.0
        %1144 = vmatpush1.xpose.msra.mxu0 0.0
        %1145 = vmatprep.subr.mxu0 0.0
        %1146 = vmatpush1.xpose.msra.mxu0 0.0
        %1147 = vmatprep.subr.mxu0 0.0
        %1148 = vmatpush1.xpose.msra.mxu0 0.0
        %1149 = vmatprep.subr.mxu0 0.0
        %1150 = vmatpush1.xpose.msra.mxu0 0.0
        %1151 = vmatprep.subr.mxu0 0.0
        %1152 = vmatpush1.xpose.msra.mxu0 0.0
        %1153 = vmatprep.subr.mxu0 0.0
        %1154 = vmatpush1.xpose.msra.mxu0 0.0
        %1155 = vmatprep.subr.mxu0 0.0
        %1156 = vmatpush1.xpose.msra.mxu0 0.0
        %1157 = vmatprep.subr.mxu0 0.0
        %1158 = vmatpush1.xpose.msra.mxu0 0.0
        %1159 = vmatprep.subr.mxu0 0.0
        %1160 = vmatpush1.xpose.msra.mxu0 0.0
        %1161 = vmatprep.subr.mxu0 0.0
        %1162 = vmatpush1.xpose.msra.mxu0 0.0
        %1163 = vmatprep.subr.mxu0 0.0
        %1164 = vmatpush1.xpose.msra.mxu0 0.0
        %1165 = vmatprep.subr.mxu0 0.0
        %1166 = vmatpush1.xpose.msra.mxu0 0.0
        %1167 = vmatprep.subr.mxu0 0.0
        %1168 = vmatpush1.xpose.msra.mxu0 0.0
        %1169 = vmatprep.subr.mxu0 0.0
        %1170 = vmatpush1.xpose.msra.mxu0 0.0
        %1171 = vmatprep.subr.mxu0 0.0
        %1172 = vmatpush1.xpose.msra.mxu0 0.0
        %1173 = vmatprep.subr.mxu0 0.0
        %1174 = vmatpush1.xpose.msra.mxu0 0.0
        %1175 = vmatprep.subr.mxu0 0.0
        %1176 = vmatpush1.xpose.msra.mxu0 0.0
        %1177 = vmatprep.subr.mxu0 0.0
        %1178 = vmatpush1.xpose.msra.mxu0 0.0
        %1179 = vmatprep.subr.mxu0 0.0
        %1180 = vmatpush1.xpose.msra.mxu0 0.0
        %1181 = vmatprep.subr.mxu0 0.0
        %1182 = vmatpush1.xpose.msra.mxu0 0.0
        %1183 = vmatprep.subr.mxu0 0.0
        %1184 = vmatpush1.xpose.msra.mxu0 0.0
        %1185 = vmatprep.subr.mxu0 0.0
        %1186 = vmatpush1.xpose.msra.mxu0 0.0
        %1187 = vmatprep.subr.mxu0 0.0
        %1188 = vmatpush1.xpose.msra.mxu0 0.0
        %1189 = vmatprep.subr.mxu0 0.0
        %1190 = vmatpush1.xpose.msra.mxu0 0.0
        %1191 = vmatprep.subr.mxu0 0.0
        %1192 = vmatpush1.xpose.msra.mxu0 0.0
        %1193 = vmatprep.subr.mxu0 0.0
        %1194 = vmatpush1.xpose.msra.mxu0 0.0
        %1195 = vmatprep.subr.mxu0 0.0
        %1196 = vmatpush1.xpose.msra.mxu0 0.0
        %1197 = vmatprep.subr.mxu0 0.0
        %1198 = vmatpush1.xpose.msra.mxu0 0.0
        %1199 = vmatprep.mubr.f32.mxu0 0.0
        %1200 = vmatmul.mubr.f32.gmra.mrb[0].mxu0 %v1131
        %v1201 = vpop.f32.mrb[0].mxu0
        %v1202 = vadd.f32 0.0, %v1201
        %v1203 = vpop.f32.mrb[0].mxu0
        %1204 = vdwg.mxu0
        %1205 = vrot.lane.b32.xlu0 %v796, 96
        %v1206 = vpop.permute.xlu0 %1205
        %1207 = vrot.lane.b32.xlu0 %v796, 32
        %v1208 = vpop.permute.xlu0 %1207
        %v1209 = vsel %vm665, %v1206, 0
        %v1211 = vsel %vm665, %v1208, 0
        %1213 = vmatprep.subr.mxu0 0.0
        %1214 = vmatpush1.xpose.msra.mxu0 %v1211
        %1215 = vmatprep.subr.mxu0 0.0
        %1216 = vmatpush1.xpose.msra.mxu0 0.0
        %1217 = vmatprep.subr.mxu0 0.0
        %1218 = vmatpush1.xpose.msra.mxu0 0.0
        %1219 = vmatprep.subr.mxu0 0.0
        %1220 = vmatpush1.xpose.msra.mxu0 0.0
        %1221 = vmatprep.subr.mxu0 0.0
        %1222 = vmatpush1.xpose.msra.mxu0 0.0
        %1223 = vmatprep.subr.mxu0 0.0
        %1224 = vmatpush1.xpose.msra.mxu0 0.0
        %1225 = vmatprep.subr.mxu0 0.0
        %1226 = vmatpush1.xpose.msra.mxu0 0.0
        %1227 = vmatprep.subr.mxu0 0.0
        %1228 = vmatpush1.xpose.msra.mxu0 0.0
        %1229 = vmatprep.subr.mxu0 0.0
        %1230 = vmatpush1.xpose.msra.mxu0 0.0
        %1231 = vmatprep.subr.mxu0 0.0
        %1232 = vmatpush1.xpose.msra.mxu0 0.0
        %1233 = vmatprep.subr.mxu0 0.0
        %1234 = vmatpush1.xpose.msra.mxu0 0.0
        %1235 = vmatprep.subr.mxu0 0.0
        %1236 = vmatpush1.xpose.msra.mxu0 0.0
        %1237 = vmatprep.subr.mxu0 0.0
        %1238 = vmatpush1.xpose.msra.mxu0 0.0
        %1239 = vmatprep.subr.mxu0 0.0
        %1240 = vmatpush1.xpose.msra.mxu0 0.0
        %1241 = vmatprep.subr.mxu0 0.0
        %1242 = vmatpush1.xpose.msra.mxu0 0.0
        %1243 = vmatprep.subr.mxu0 0.0
        %1244 = vmatpush1.xpose.msra.mxu0 0.0
        %1245 = vmatprep.subr.mxu0 0.0
        %1246 = vmatpush1.xpose.msra.mxu0 0.0
        %1247 = vmatprep.subr.mxu0 0.0
        %1248 = vmatpush1.xpose.msra.mxu0 0.0
        %1249 = vmatprep.subr.mxu0 0.0
        %1250 = vmatpush1.xpose.msra.mxu0 0.0
        %1251 = vmatprep.subr.mxu0 0.0
        %1252 = vmatpush1.xpose.msra.mxu0 0.0
        %1253 = vmatprep.subr.mxu0 0.0
        %1254 = vmatpush1.xpose.msra.mxu0 0.0
        %1255 = vmatprep.subr.mxu0 0.0
        %1256 = vmatpush1.xpose.msra.mxu0 0.0
        %1257 = vmatprep.subr.mxu0 0.0
        %1258 = vmatpush1.xpose.msra.mxu0 0.0
        %1259 = vmatprep.subr.mxu0 0.0
        %1260 = vmatpush1.xpose.msra.mxu0 0.0
        %1261 = vmatprep.subr.mxu0 0.0
        %1262 = vmatpush1.xpose.msra.mxu0 0.0
        %1263 = vmatprep.subr.mxu0 0.0
        %1264 = vmatpush1.xpose.msra.mxu0 0.0
        %1265 = vmatprep.subr.mxu0 0.0
        %1266 = vmatpush1.xpose.msra.mxu0 0.0
        %1267 = vmatprep.subr.mxu0 0.0
        %1268 = vmatpush1.xpose.msra.mxu0 0.0
        %1269 = vmatprep.subr.mxu0 0.0
        %1270 = vmatpush1.xpose.msra.mxu0 0.0
        %1271 = vmatprep.subr.mxu0 0.0
        %1272 = vmatpush1.xpose.msra.mxu0 0.0
        %1273 = vmatprep.subr.mxu0 0.0
        %1274 = vmatpush1.xpose.msra.mxu0 0.0
        %1275 = vmatprep.subr.mxu0 0.0
        %1276 = vmatpush1.xpose.msra.mxu0 0.0
        %1277 = vmatprep.mubr.f32.mxu0 0.0
        %1278 = vmatmul.mubr.f32.gmra.mrb[0].mxu0 %v1209
        %v1279 = vpop.f32.mrb[0].mxu0
        %v1280 = vadd.f32 0.0, %v1279
        %v1281 = vpop.f32.mrb[0].mxu0
        %1282 = vdwg.mxu0
        %v1283 = vmul.f32 %v1202, 0.17677669
        %v1284 = vmul.f32 %v1280, 0.17677669
        %v1285 = vsel %vm956, %v1283, -inf
        %1286 = vmax.xlane.f32.xlu0 %v1285
        %v1287 = vpop.xlane.xlu0 %1286
        %v1288 = vsel %vm956, %v1284, -inf
        %1289 = vmax.xlane.f32.xlu0 %v1288
        %v1290 = vpop.xlane.xlu0 %1289
        %v1291 = vsub.f32 %v1283, %v1287
        %v1292 = vsub.f32 %v1284, %v1290
        %v1293 = vmul.f32 %v1291, 1.442695
        %v1294 = vpow.pop %v1293
        %v1295 = vmul.f32 %v1292, 1.442695
        %v1296 = vpow.pop %v1295
        %v1297 = vsel %vm956, %v1294, 0.0
        %1298 = vadd.xlane.f32.xlu0 %v1297
        %v1299 = vpop.xlane.xlu0 %1298
        %v1300 = vsel %vm956, %v1296, 0.0
        %1301 = vadd.xlane.f32.xlu0 %v1300
        %v1302 = vpop.xlane.xlu0 %1301
        %v1303 = vrcp.pop %v1299
        %v1304 = vmul.f32 %v1294, %v1303
        %v1305 = vrcp.pop %v1302
        %v1306 = vmul.f32 %v1296, %v1305
        %1308 = vrot.lane.b32.xlu0 %v792, 96
        %v1309 = vpop.permute.xlu0 %1308
        %v1312 = vsel %vm956, %v1304, 0
        %1314 = vmatprep.subr.mxu0 0.0
        %1315 = vmatpush1.msra.mxu0 %v1309
        %1316 = vmatprep.subr.mxu0 0.0
        %1317 = vmatpush1.msra.mxu0 0.0
        %1318 = vmatprep.subr.mxu0 0.0
        %1319 = vmatpush1.msra.mxu0 0.0
        %1320 = vmatprep.subr.mxu0 0.0
        %1321 = vmatpush1.msra.mxu0 0.0
        %1322 = vmatprep.subr.mxu0 0.0
        %1323 = vmatpush1.msra.mxu0 0.0
        %1324 = vmatprep.subr.mxu0 0.0
        %1325 = vmatpush1.msra.mxu0 0.0
        %1326 = vmatprep.subr.mxu0 0.0
        %1327 = vmatpush1.msra.mxu0 0.0
        %1328 = vmatprep.subr.mxu0 0.0
        %1329 = vmatpush1.msra.mxu0 0.0
        %1330 = vmatprep.subr.mxu0 0.0
        %1331 = vmatpush1.msra.mxu0 0.0
        %1332 = vmatprep.subr.mxu0 0.0
        %1333 = vmatpush1.msra.mxu0 0.0
        %1334 = vmatprep.subr.mxu0 0.0
        %1335 = vmatpush1.msra.mxu0 0.0
        %1336 = vmatprep.subr.mxu0 0.0
        %1337 = vmatpush1.msra.mxu0 0.0
        %1338 = vmatprep.subr.mxu0 0.0
        %1339 = vmatpush1.msra.mxu0 0.0
        %1340 = vmatprep.subr.mxu0 0.0
        %1341 = vmatpush1.msra.mxu0 0.0
        %1342 = vmatprep.subr.mxu0 0.0
        %1343 = vmatpush1.msra.mxu0 0.0
        %1344 = vmatprep.subr.mxu0 0.0
        %1345 = vmatpush1.msra.mxu0 0.0
        %1346 = vmatprep.subr.mxu0 0.0
        %1347 = vmatpush1.msra.mxu0 0.0
        %1348 = vmatprep.subr.mxu0 0.0
        %1349 = vmatpush1.msra.mxu0 0.0
        %1350 = vmatprep.subr.mxu0 0.0
        %1351 = vmatpush1.msra.mxu0 0.0
        %1352 = vmatprep.subr.mxu0 0.0
        %1353 = vmatpush1.msra.mxu0 0.0
        %1354 = vmatprep.subr.mxu0 0.0
        %1355 = vmatpush1.msra.mxu0 0.0
        %1356 = vmatprep.subr.mxu0 0.0
        %1357 = vmatpush1.msra.mxu0 0.0
        %1358 = vmatprep.subr.mxu0 0.0
        %1359 = vmatpush1.msra.mxu0 0.0
        %1360 = vmatprep.subr.mxu0 0.0
        %1361 = vmatpush1.msra.mxu0 0.0
        %1362 = vmatprep.subr.mxu0 0.0
        %1363 = vmatpush1.msra.mxu0 0.0
        %1364 = vmatprep.subr.mxu0 0.0
        %1365 = vmatpush1.msra.mxu0 0.0
        %1366 = vmatprep.subr.mxu0 0.0
        %1367 = vmatpush1.msra.mxu0 0.0
        %1368 = vmatprep.subr.mxu0 0.0
        %1369 = vmatpush1.msra.mxu0 0.0
        %1370 = vmatprep.subr.mxu0 0.0
        %1371 = vmatpush1.msra.mxu0 0.0
        %1372 = vmatprep.subr.mxu0 0.0
        %1373 = vmatpush1.msra.mxu0 0.0
        %1374 = vmatprep.subr.mxu0 0.0
        %1375 = vmatpush1.msra.mxu0 0.0
        %1376 = vmatprep.subr.mxu0 0.0
        %1377 = vmatpush1.msra.mxu0 0.0
        %1378 = vmatprep.mubr.f32.mxu0 0.0
        %1379 = vmatmul.mubr.f32.gmra.mrb[0].mxu0 %v1312
        %v1380 = vpop.f32.mrb[0].mxu0
        %v1381 = vadd.f32 0.0, %v1380
        %v1382 = vpop.f32.mrb[0].mxu0
        %1383 = vdwg.mxu0
        %1385 = vrot.lane.b32.xlu0 %v798, 96
        %v1386 = vpop.permute.xlu0 %1385
        %v1389 = vsel %vm956, %v1306, 0
        %1391 = vmatprep.subr.mxu0 0.0
        %1392 = vmatpush1.msra.mxu0 %v1386
        %1393 = vmatprep.subr.mxu0 0.0
        %1394 = vmatpush1.msra.mxu0 0.0
        %1395 = vmatprep.subr.mxu0 0.0
        %1396 = vmatpush1.msra.mxu0 0.0
        %1397 = vmatprep.subr.mxu0 0.0
        %1398 = vmatpush1.msra.mxu0 0.0
        %1399 = vmatprep.subr.mxu0 0.0
        %1400 = vmatpush1.msra.mxu0 0.0
        %1401 = vmatprep.subr.mxu0 0.0
        %1402 = vmatpush1.msra.mxu0 0.0
        %1403 = vmatprep.subr.mxu0 0.0
        %1404 = vmatpush1.msra.mxu0 0.0
        %1405 = vmatprep.subr.mxu0 0.0
        %1406 = vmatpush1.msra.mxu0 0.0
        %1407 = vmatprep.subr.mxu0 0.0
        %1408 = vmatpush1.msra.mxu0 0.0
        %1409 = vmatprep.subr.mxu0 0.0
        %1410 = vmatpush1.msra.mxu0 0.0
        %1411 = vmatprep.subr.mxu0 0.0
        %1412 = vmatpush1.msra.mxu0 0.0
        %1413 = vmatprep.subr.mxu0 0.0
        %1414 = vmatpush1.msra.mxu0 0.0
        %1415 = vmatprep.subr.mxu0 0.0
        %1416 = vmatpush1.msra.mxu0 0.0
        %1417 = vmatprep.subr.mxu0 0.0
        %1418 = vmatpush1.msra.mxu0 0.0
        %1419 = vmatprep.subr.mxu0 0.0
        %1420 = vmatpush1.msra.mxu0 0.0
        %1421 = vmatprep.subr.mxu0 0.0
        %1422 = vmatpush1.msra.mxu0 0.0
        %1423 = vmatprep.subr.mxu0 0.0
        %1424 = vmatpush1.msra.mxu0 0.0
        %1425 = vmatprep.subr.mxu0 0.0
        %1426 = vmatpush1.msra.mxu0 0.0
        %1427 = vmatprep.subr.mxu0 0.0
        %1428 = vmatpush1.msra.mxu0 0.0
        %1429 = vmatprep.subr.mxu0 0.0
        %1430 = vmatpush1.msra.mxu0 0.0
        %1431 = vmatprep.subr.mxu0 0.0
        %1432 = vmatpush1.msra.mxu0 0.0
        %1433 = vmatprep.subr.mxu0 0.0
        %1434 = vmatpush1.msra.mxu0 0.0
        %1435 = vmatprep.subr.mxu0 0.0
        %1436 = vmatpush1.msra.mxu0 0.0
        %1437 = vmatprep.subr.mxu0 0.0
        %1438 = vmatpush1.msra.mxu0 0.0
        %1439 = vmatprep.subr.mxu0 0.0
        %1440 = vmatpush1.msra.mxu0 0.0
        %1441 = vmatprep.subr.mxu0 0.0
        %1442 = vmatpush1.msra.mxu0 0.0
        %1443 = vmatprep.subr.mxu0 0.0
        %1444 = vmatpush1.msra.mxu0 0.0
        %1445 = vmatprep.subr.mxu0 0.0
        %1446 = vmatpush1.msra.mxu0 0.0
        %1447 = vmatprep.subr.mxu0 0.0
        %1448 = vmatpush1.msra.mxu0 0.0
        %1449 = vmatprep.subr.mxu0 0.0
        %1450 = vmatpush1.msra.mxu0 0.0
        %1451 = vmatprep.subr.mxu0 0.0
        %1452 = vmatpush1.msra.mxu0 0.0
        %1453 = vmatprep.subr.mxu0 0.0
        %1454 = vmatpush1.msra.mxu0 0.0
        %1455 = vmatprep.mubr.f32.mxu0 0.0
        %1456 = vmatmul.mubr.f32.gmra.mrb[0].mxu0 %v1389
        %v1457 = vpop.f32.mrb[0].mxu0
        %v1458 = vadd.f32 0.0, %v1457
        %v1459 = vpop.f32.mrb[0].mxu0
        %1460 = vdwg.mxu0
        %1463 = vrot.lane.b32.xlu0 %v1381, 32
        %v1464 = vpop.permute.xlu0 %1463
        %1465 = vrot.lane.b32.xlu0 %v1458, 32
        %v1466 = vpop.permute.xlu0 %1465
        %vm1469 = vcmask 523520
        %1470 = vst.msk [vmem:[#allocation3] sm:$0xff] %vm1469, %v1464
        %1471 = vst.msk [vmem:[#allocation3 + $0x8] sm:$0xff] %vm1469, %v1466
        %v1472 = vld [vmem:[#allocation3] sm:$0xff]
        %v1473 = vld [vmem:[#allocation3 + $0x8] sm:$0xff]
        %v1474 = vld [vmem:[%s619] sm:$0xff]
        %v1475 = vld [vmem:[%s619 + $0x8] sm:$0xff]
        %v1476 = vld [vmem:[%s619 + $0x10] sm:$0xff]
        %v1477 = vld [vmem:[%s619 + $0x18] sm:$0xff]
        %v1478 = vld [vmem:[%s619 + $0x20] sm:$0xff]
        %v1479 = vld [vmem:[%s619 + $0x28] sm:$0xff]
        %v1480 = vld [vmem:[%s619 + $0x30] sm:$0xff]
        %v1481 = vld [vmem:[%s619 + $0x38] sm:$0xff]
        %v1482 = vld [vmem:[%s622] sm:$0x1]
        %v1484 = vlaneseq
        %v1485 = vshrl.u32 %v1484, 7
        %v1486 = vsub.s32 0, %v1485
        %v1487 = vrot.slane %v1482, %v1486
        %vm1489 = vcmask 523264
        %v1491 = vsel %vm1489, %v1472, 0
        %v1494 = vsel %vm1489, %v1473, 0
        %1496 = vmatprep.subr.mxu0 0.0
        %1497 = vmatpush1.msra.mxu0 %v1474
        %1498 = vmatprep.subr.mxu0 0.0
        %1499 = vmatpush1.msra.mxu0 %v1475
        %1500 = vmatprep.subr.mxu0 0.0
        %1501 = vmatpush1.msra.mxu0 %v1476
        %1502 = vmatprep.subr.mxu0 0.0
        %1503 = vmatpush1.msra.mxu0 %v1477
        %1504 = vmatprep.subr.mxu0 0.0
        %1505 = vmatpush1.msra.mxu0 %v1478
        %1506 = vmatprep.subr.mxu0 0.0
        %1507 = vmatpush1.msra.mxu0 %v1479
        %1508 = vmatprep.subr.mxu0 0.0
        %1509 = vmatpush1.msra.mxu0 %v1480
        %1510 = vmatprep.subr.mxu0 0.0
        %1511 = vmatpush1.msra.mxu0 %v1481
        %1512 = vmatprep.subr.mxu0 0.0
        %1513 = vmatpush1.msra.mxu0 0.0
        %1514 = vmatprep.subr.mxu0 0.0
        %1515 = vmatpush1.msra.mxu0 0.0
        %1516 = vmatprep.subr.mxu0 0.0
        %1517 = vmatpush1.msra.mxu0 0.0
        %1518 = vmatprep.subr.mxu0 0.0
        %1519 = vmatpush1.msra.mxu0 0.0
        %1520 = vmatprep.subr.mxu0 0.0
        %1521 = vmatpush1.msra.mxu0 0.0
        %1522 = vmatprep.subr.mxu0 0.0
        %1523 = vmatpush1.msra.mxu0 0.0
        %1524 = vmatprep.subr.mxu0 0.0
        %1525 = vmatpush1.msra.mxu0 0.0
        %1526 = vmatprep.subr.mxu0 0.0
        %1527 = vmatpush1.msra.mxu0 0.0
        %1528 = vmatprep.subr.mxu0 0.0
        %1529 = vmatpush1.msra.mxu0 0.0
        %1530 = vmatprep.subr.mxu0 0.0
        %1531 = vmatpush1.msra.mxu0 0.0
        %1532 = vmatprep.subr.mxu0 0.0
        %1533 = vmatpush1.msra.mxu0 0.0
        %1534 = vmatprep.subr.mxu0 0.0
        %1535 = vmatpush1.msra.mxu0 0.0
        %1536 = vmatprep.subr.mxu0 0.0
        %1537 = vmatpush1.msra.mxu0 0.0
        %1538 = vmatprep.subr.mxu0 0.0
        %1539 = vmatpush1.msra.mxu0 0.0
        %1540 = vmatprep.subr.mxu0 0.0
        %1541 = vmatpush1.msra.mxu0 0.0
        %1542 = vmatprep.subr.mxu0 0.0
        %1543 = vmatpush1.msra.mxu0 0.0
        %1544 = vmatprep.subr.mxu0 0.0
        %1545 = vmatpush1.msra.mxu0 0.0
        %1546 = vmatprep.subr.mxu0 0.0
        %1547 = vmatpush1.msra.mxu0 0.0
        %1548 = vmatprep.subr.mxu0 0.0
        %1549 = vmatpush1.msra.mxu0 0.0
        %1550 = vmatprep.subr.mxu0 0.0
        %1551 = vmatpush1.msra.mxu0 0.0
        %1552 = vmatprep.subr.mxu0 0.0
        %1553 = vmatpush1.msra.mxu0 0.0
        %1554 = vmatprep.subr.mxu0 0.0
        %1555 = vmatpush1.msra.mxu0 0.0
        %1556 = vmatprep.subr.mxu0 0.0
        %1557 = vmatpush1.msra.mxu0 0.0
        %1558 = vmatprep.subr.mxu0 0.0
        %1559 = vmatpush1.msra.mxu0 0.0
        %1560 = vmatprep.mubr.f32.mxu0 0.0
        %1561 = vmatmul.mubr.f32.gmra.mrb[0].mxu0 %v1491
        %v1562 = vpop.f32.mrb[0].mxu0
        %v1563 = vadd.f32 %v1487, %v1562
        %v1564 = vpop.f32.mrb[0].mxu0
        %1565 = vmatprep.mubr.f32.mxu0 0.0
        %1566 = vmatmul.mubr.f32.gmra.mrb[0].mxu0 %v1494
        %v1567 = vpop.f32.mrb[0].mxu0
        %v1568 = vadd.f32 %v1487, %v1567
        %v1569 = vpop.f32.mrb[0].mxu0
        %1570 = vdwg.mxu0
        %v1571 = vadd.f32 %v661, %v1563
        %v1572 = vadd.f32 %v662, %v1568
        %v1573 = vld [vmem:[%s631] sm:$0x1]
        %v1574 = vld [vmem:[%s634] sm:$0x1]
        %v1575 = vsel %vm665, %v1571, 0.0
        %1576 = vadd.xlane.f32.xlu0 %v1575
        %v1577 = vpop.xlane.xlu0 %1576
        %v1578 = vsel %vm665, %v1572, 0.0
        %1579 = vadd.xlane.f32.xlu0 %v1578
        %v1580 = vpop.xlane.xlu0 %1579
        %v1581 = vmul.f32 %v1577, %v672
        %v1582 = vmul.f32 %v1580, %v672
        %v1583 = vsub.f32 %v1571, %v1581
        %v1584 = vsub.f32 %v1572, %v1582
        %v1585 = vmul.f32 %v1583, %v1583
        %v1586 = vmul.f32 %v1584, %v1584
        %v1587 = vsel %vm665, %v1585, 0.0
        %1588 = vadd.xlane.f32.xlu0 %v1587
        %v1589 = vpop.xlane.xlu0 %1588
        %v1590 = vsel %vm665, %v1586, 0.0
        %1591 = vadd.xlane.f32.xlu0 %v1590
        %v1592 = vpop.xlane.xlu0 %1591
        %v1593 = vmul.f32 %v1589, %v672
        %v1594 = vmul.f32 %v1592, %v672
        %v1595 = vadd.f32 %v1593, 1e-05
        %v1596 = vadd.f32 %v1594, 1e-05
        %v1597 = vrsqrt.pop %v1595
        %v1598 = vrsqrt.pop %v1596
        %v1599 = vmul.f32 %v1583, %v1597
        %v1600 = vmul.f32 %v1584, %v1598
        %v1602 = vlaneseq
        %v1603 = vshrl.u32 %v1602, 7
        %v1604 = vsub.s32 0, %v1603
        %v1605 = vrot.slane %v1573, %v1604
        %v1607 = vmul.f32 %v1599, %v1605
        %v1608 = vmul.f32 %v1600, %v1605
        %v1610 = vlaneseq
        %v1611 = vshrl.u32 %v1610, 7
        %v1612 = vsub.s32 0, %v1611
        %v1613 = vrot.slane %v1574, %v1612
        %v1615 = vadd.f32 %v1607, %v1613
        %v1616 = vadd.f32 %v1608, %v1613
        %v1617 = vld [vmem:[%s639] sm:$0xff]
        %v1618 = vld [vmem:[%s639 + $0x8] sm:$0xff]
        %v1619 = vld [vmem:[%s639 + $0x10] sm:$0xff]
        %v1620 = vld [vmem:[%s639 + $0x18] sm:$0xff]
        %v1621 = vld [vmem:[%s642] sm:$0x1]
        %v1623 = vlaneseq
        %v1624 = vshrl.u32 %v1623, 7
        %v1625 = vsub.s32 0, %v1624
        %v1626 = vrot.slane %v1621, %v1625
        %v1629 = vsel %vm665, %v1615, 0
        %v1632 = vsel %vm665, %v1616, 0
        %1634 = vmatprep.subr.mxu0 0.0
        %1635 = vmatpush1.msra.mxu0 %v1617
        %1636 = vmatprep.subr.mxu0 0.0
        %1637 = vmatpush1.msra.mxu0 %v1618
        %1638 = vmatprep.subr.mxu0 0.0
        %1639 = vmatpush1.msra.mxu0 %v1619
        %1640 = vmatprep.subr.mxu0 0.0
        %1641 = vmatpush1.msra.mxu0 %v1620
        %1642 = vmatprep.subr.mxu0 0.0
        %1643 = vmatpush1.msra.mxu0 0.0
        %1644 = vmatprep.subr.mxu0 0.0
        %1645 = vmatpush1.msra.mxu0 0.0
        %1646 = vmatprep.subr.mxu0 0.0
        %1647 = vmatpush1.msra.mxu0 0.0
        %1648 = vmatprep.subr.mxu0 0.0
        %1649 = vmatpush1.msra.mxu0 0.0
        %1650 = vmatprep.subr.mxu0 0.0
        %1651 = vmatpush1.msra.mxu0 0.0
        %1652 = vmatprep.subr.mxu0 0.0
        %1653 = vmatpush1.msra.mxu0 0.0
        %1654 = vmatprep.subr.mxu0 0.0
        %1655 = vmatpush1.msra.mxu0 0.0
        %1656 = vmatprep.subr.mxu0 0.0
        %1657 = vmatpush1.msra.mxu0 0.0
        %1658 = vmatprep.subr.mxu0 0.0
        %1659 = vmatpush1.msra.mxu0 0.0
        %1660 = vmatprep.subr.mxu0 0.0
        %1661 = vmatpush1.msra.mxu0 0.0
        %1662 = vmatprep.subr.mxu0 0.0
        %1663 = vmatpush1.msra.mxu0 0.0
        %1664 = vmatprep.subr.mxu0 0.0
        %1665 = vmatpush1.msra.mxu0 0.0
        %1666 = vmatprep.subr.mxu0 0.0
        %1667 = vmatpush1.msra.mxu0 0.0
        %1668 = vmatprep.subr.mxu0 0.0
        %1669 = vmatpush1.msra.mxu0 0.0
        %1670 = vmatprep.subr.mxu0 0.0
        %1671 = vmatpush1.msra.mxu0 0.0
        %1672 = vmatprep.subr.mxu0 0.0
        %1673 = vmatpush1.msra.mxu0 0.0
        %1674 = vmatprep.subr.mxu0 0.0
        %1675 = vmatpush1.msra.mxu0 0.0
        %1676 = vmatprep.subr.mxu0 0.0
        %1677 = vmatpush1.msra.mxu0 0.0
        %1678 = vmatprep.subr.mxu0 0.0
        %1679 = vmatpush1.msra.mxu0 0.0
        %1680 = vmatprep.subr.mxu0 0.0
        %1681 = vmatpush1.msra.mxu0 0.0
        %1682 = vmatprep.subr.mxu0 0.0
        %1683 = vmatpush1.msra.mxu0 0.0
        %1684 = vmatprep.subr.mxu0 0.0
        %1685 = vmatpush1.msra.mxu0 0.0
        %1686 = vmatprep.subr.mxu0 0.0
        %1687 = vmatpush1.msra.mxu0 0.0
        %1688 = vmatprep.subr.mxu0 0.0
        %1689 = vmatpush1.msra.mxu0 0.0
        %1690 = vmatprep.subr.mxu0 0.0
        %1691 = vmatpush1.msra.mxu0 0.0
        %1692 = vmatprep.subr.mxu0 0.0
        %1693 = vmatpush1.msra.mxu0 0.0
        %1694 = vmatprep.subr.mxu0 0.0
        %1695 = vmatpush1.msra.mxu0 0.0
        %1696 = vmatprep.subr.mxu0 0.0
        %1697 = vmatpush1.msra.mxu0 0.0
        %1698 = vmatprep.mubr.f32.mxu0 0.0
        %1699 = vmatmul.mubr.f32.gmra.mrb[0].mxu0 %v1629
        %v1700 = vpop.f32.mrb[0].mxu0
        %v1701 = vadd.f32 %v1626, %v1700
        %v1702 = vpop.f32.mrb[0].mxu0
        %1703 = vmatprep.mubr.f32.mxu0 0.0
        %1704 = vmatmul.mubr.f32.gmra.mrb[0].mxu0 %v1632
        %v1705 = vpop.f32.mrb[0].mxu0
        %v1706 = vadd.f32 %v1626, %v1705
        %v1707 = vpop.f32.mrb[0].mxu0
        %1708 = vdwg.mxu0
        %v1709 = vmax.f32 %v1701, 0.0
        %v1710 = vmax.f32 %v1706, 0.0
        %v1711 = vld [vmem:[%s647] sm:$0xff]
        %v1712 = vld [vmem:[%s647 + $0x8] sm:$0xff]
        %v1713 = vld [vmem:[%s647 + $0x10] sm:$0xff]
        %v1714 = vld [vmem:[%s647 + $0x18] sm:$0xff]
        %v1715 = vld [vmem:[%s647 + $0x20] sm:$0xff]
        %v1716 = vld [vmem:[%s647 + $0x28] sm:$0xff]
        %v1717 = vld [vmem:[%s647 + $0x30] sm:$0xff]
        %v1718 = vld [vmem:[%s647 + $0x38] sm:$0xff]
        %v1719 = vld [vmem:[%s647 + $0x40] sm:$0xff]
        %v1720 = vld [vmem:[%s647 + $0x48] sm:$0xff]
        %v1721 = vld [vmem:[%s647 + $0x50] sm:$0xff]
        %v1722 = vld [vmem:[%s647 + $0x58] sm:$0xff]
        %v1723 = vld [vmem:[%s647 + $0x60] sm:$0xff]
        %v1724 = vld [vmem:[%s647 + $0x68] sm:$0xff]
        %v1725 = vld [vmem:[%s647 + $0x70] sm:$0xff]
        %v1726 = vld [vmem:[%s647 + $0x78] sm:$0xff]
        %v1727 = vld [vmem:[%s650] sm:$0x1]
        %v1729 = vlaneseq
        %v1730 = vshrl.u32 %v1729, 7
        %v1731 = vsub.s32 0, %v1730
        %v1732 = vrot.slane %v1727, %v1731
        %1734 = vmatprep.subr.mxu0 0.0
        %1735 = vmatpush1.msra.mxu0 %v1711
        %1736 = vmatprep.subr.mxu0 0.0
        %1737 = vmatpush1.msra.mxu0 %v1712
        %1738 = vmatprep.subr.mxu0 0.0
        %1739 = vmatpush1.msra.mxu0 %v1713
        %1740 = vmatprep.subr.mxu0 0.0
        %1741 = vmatpush1.msra.mxu0 %v1714
        %1742 = vmatprep.subr.mxu0 0.0
        %1743 = vmatpush1.msra.mxu0 %v1715
        %1744 = vmatprep.subr.mxu0 0.0
        %1745 = vmatpush1.msra.mxu0 %v1716
        %1746 = vmatprep.subr.mxu0 0.0
        %1747 = vmatpush1.msra.mxu0 %v1717
        %1748 = vmatprep.subr.mxu0 0.0
        %1749 = vmatpush1.msra.mxu0 %v1718
        %1750 = vmatprep.subr.mxu0 0.0
        %1751 = vmatpush1.msra.mxu0 %v1719
        %1752 = vmatprep.subr.mxu0 0.0
        %1753 = vmatpush1.msra.mxu0 %v1720
        %1754 = vmatprep.subr.mxu0 0.0
        %1755 = vmatpush1.msra.mxu0 %v1721
        %1756 = vmatprep.subr.mxu0 0.0
        %1757 = vmatpush1.msra.mxu0 %v1722
        %1758 = vmatprep.subr.mxu0 0.0
        %1759 = vmatpush1.msra.mxu0 %v1723
        %1760 = vmatprep.subr.mxu0 0.0
        %1761 = vmatpush1.msra.mxu0 %v1724
        %1762 = vmatprep.subr.mxu0 0.0
        %1763 = vmatpush1.msra.mxu0 %v1725
        %1764 = vmatprep.subr.mxu0 0.0
        %1765 = vmatpush1.msra.mxu0 %v1726
        %1766 = vmatprep.subr.mxu0 0.0
        %1767 = vmatpush1.msra.mxu0 0.0
        %1768 = vmatprep.subr.mxu0 0.0
        %1769 = vmatpush1.msra.mxu0 0.0
        %1770 = vmatprep.subr.mxu0 0.0
        %1771 = vmatpush1.msra.mxu0 0.0
        %1772 = vmatprep.subr.mxu0 0.0
        %1773 = vmatpush1.msra.mxu0 0.0
        %1774 = vmatprep.subr.mxu0 0.0
        %1775 = vmatpush1.msra.mxu0 0.0
        %1776 = vmatprep.subr.mxu0 0.0
        %1777 = vmatpush1.msra.mxu0 0.0
        %1778 = vmatprep.subr.mxu0 0.0
        %1779 = vmatpush1.msra.mxu0 0.0
        %1780 = vmatprep.subr.mxu0 0.0
        %1781 = vmatpush1.msra.mxu0 0.0
        %1782 = vmatprep.subr.mxu0 0.0
        %1783 = vmatpush1.msra.mxu0 0.0
        %1784 = vmatprep.subr.mxu0 0.0
        %1785 = vmatpush1.msra.mxu0 0.0
        %1786 = vmatprep.subr.mxu0 0.0
        %1787 = vmatpush1.msra.mxu0 0.0
        %1788 = vmatprep.subr.mxu0 0.0
        %1789 = vmatpush1.msra.mxu0 0.0
        %1790 = vmatprep.subr.mxu0 0.0
        %1791 = vmatpush1.msra.mxu0 0.0
        %1792 = vmatprep.subr.mxu0 0.0
        %1793 = vmatpush1.msra.mxu0 0.0
        %1794 = vmatprep.subr.mxu0 0.0
        %1795 = vmatpush1.msra.mxu0 0.0
        %1796 = vmatprep.subr.mxu0 0.0
        %1797 = vmatpush1.msra.mxu0 0.0
        %1798 = vmatprep.mubr.f32.mxu0 0.0
        %1799 = vmatmul.mubr.f32.gmra.mrb[0].mxu0 %v1709
        %v1800 = vpop.f32.mrb[0].mxu0
        %v1801 = vadd.f32 %v1732, %v1800
        %v1802 = vpop.f32.mrb[0].mxu0
        %1803 = vmatprep.mubr.f32.mxu0 0.0
        %1804 = vmatmul.mubr.f32.gmra.mrb[0].mxu0 %v1710
        %v1805 = vpop.f32.mrb[0].mxu0
        %v1806 = vadd.f32 %v1732, %v1805
        %v1807 = vpop.f32.mrb[0].mxu0
        %1808 = vdwg.mxu0
        %v1809 = vadd.f32 %v1571, %v1801
        %v1810 = vadd.f32 %v1572, %v1806
        %1811 = vst.msk [vmem:[#allocation2] sm:$0xff] %vm665, %v1809
        %1812 = vst.msk [vmem:[#allocation2 + $0x8] sm:$0xff] %vm665, %v1810
        %p1813 = scmp.eq.s32.totalorder %s31, 1
        // Predicated region
        $region81: #{transformer_encoder.1} parent=75 // pred_check
          %p1814 = pneg %p1813
        $region82: #{transformer_encoder.1} parent=75 // pred_check_branch
          %1816 = sbr.rel (%p1814) target = $region84
        $region83: #{transformer_encoder.1} parent=75 // pred_region
          %v1817 = vld [vmem:[%s12] sm:$0x1]
          %v1818 = vld [vmem:[%s13] sm:$0x1]
          %v1819 = vsel %vm665, %v1809, 0.0
          %1820 = vadd.xlane.f32.xlu0 %v1819
          %v1821 = vpop.xlane.xlu0 %1820
          %v1822 = vsel %vm665, %v1810, 0.0
          %1823 = vadd.xlane.f32.xlu0 %v1822
          %v1824 = vpop.xlane.xlu0 %1823
          %v1825 = vmul.f32 %v1821, %v672
          %v1826 = vmul.f32 %v1824, %v672
          %v1827 = vsub.f32 %v1809, %v1825
          %v1828 = vsub.f32 %v1810, %v1826
          %v1829 = vmul.f32 %v1827, %v1827
          %v1830 = vmul.f32 %v1828, %v1828
          %v1831 = vsel %vm665, %v1829, 0.0
          %1832 = vadd.xlane.f32.xlu0 %v1831
          %v1833 = vpop.xlane.xlu0 %1832
          %v1834 = vsel %vm665, %v1830, 0.0
          %1835 = vadd.xlane.f32.xlu0 %v1834
          %v1836 = vpop.xlane.xlu0 %1835
          %v1837 = vmul.f32 %v1833, %v672
          %v1838 = vmul.f32 %v1836, %v672
          %v1839 = vadd.f32 %v1837, 1e-05
          %v1840 = vadd.f32 %v1838, 1e-05
          %v1841 = vrsqrt.pop %v1839
          %v1842 = vrsqrt.pop %v1840
          %v1843 = vmul.f32 %v1827, %v1841
          %v1844 = vmul.f32 %v1828, %v1842
          %v1846 = vlaneseq
          %v1847 = vshrl.u32 %v1846, 7
          %v1848 = vsub.s32 0, %v1847
          %v1849 = vrot.slane %v1817, %v1848
          %v1851 = vmul.f32 %v1843, %v1849
          %v1852 = vmul.f32 %v1844, %v1849
          %v1854 = vlaneseq
          %v1855 = vshrl.u32 %v1854, 7
          %v1856 = vsub.s32 0, %v1855
          %v1857 = vrot.slane %v1818, %v1856
          %v1859 = vadd.f32 %v1851, %v1857
          %v1860 = vadd.f32 %v1852, %v1857
          %1861 = vst.msk [vmem:[#allocation4] sm:$0xff] %vm665, %v1859
          %1862 = vst.msk [vmem:[#allocation4 + $0x8] sm:$0xff] %vm665, %v1860
        $region84: #{transformer_encoder.1} parent=75 // pred_fallthru
          _
        // Predicated region
        $region85: #{transformer_encoder.1} parent=75 // pred_check
          %p1863 = pneg %p410
        $region86: #{transformer_encoder.1} parent=75 // pred_check_branch
          %1865 = sbr.rel (%p1863) target = $region88
        $region87: #{transformer_encoder.1} parent=75 // pred_region
          %s1866 = smul.u32 2, %s30
          %s1868 = ssub.s32 256, 256
          %1869 = vsyncadd [#allocation5], %s1868
          %s1870 = smul.addr %s1866, 128
          %s1871 = scalar_lea.hbm %s14, %s1870
          %s1872 = sshll.u32 [#allocation4], 4
          %s1873 = int_to_ptr.vmem [resolvable:$true] %s1872
          %1878 = dma.vmem_to_hbm [thread:$0]  %s1873, 256, %s1871, [#allocation5], 128, 128, 8
        $region88: #{transformer_encoder.1} parent=75 // pred_fallthru
          _
        // Predicated region
        $region89: #{transformer_encoder.1} parent=75 // pred_check
          %p1879 = pneg %p410
        $region90: #{transformer_encoder.1} parent=75 // pred_check_branch
          %1881 = sbr.rel (%p1879) target = $region92
        $region91: #{transformer_encoder.1} parent=75 // pred_region
          %1882 = dma.done [#allocation5], 256
        $region92: #{transformer_encoder.1} parent=75 // pred_fallthru
          _
      $region76: #{transformer_encoder.1} parent=5 // pred_fallthru
        _
      %p1883 = scmp.le.s32.totalorder 2, %s21
      // Predicated region
      $region93: #{transformer_encoder.1} parent=5 // pred_check
        %p1884 = pneg %p1883
      $region94: #{transformer_encoder.1} parent=5 // pred_check_branch
        %1886 = sbr.rel (%p1884) target = $region96
      $region95: #{transformer_encoder.1} parent=5 // pred_region
        %s1887 = ssub.s32 %s21, 2
      $region96: #{transformer_encoder.1} parent=5 // pred_fallthru
        _
    $region6: #{transformer_encoder.1} parent=1 // loop_footer
      %s25 = sadd.s32 1, %s21
    $region7: #{transformer_encoder.1} parent=1 // loop_footer_branch
      %20 = sbr.rel target = $region3
    $region8: #{transformer_encoder.1} parent=1 // loop_exit
      _
    %1888 = vsyncpa [#allocation5], 1
    %s1889 = scalar_lea.sflag [#allocation5], 1
    %1890 = vsyncpa %s1889, 1

</llo_original>
